<compile_context>
chip_gen: v7x
topology: tpu7x:2x2x1
jax: 0.10.0
libtpu: 0.0.40
codegen_flags: <defaults>
</compile_context>

<pallas_src>
import functools

import jax
import jax.numpy as jnp
from jax.experimental import pallas as pl
from jax.experimental.pallas import tpu as pltpu

IN_FEATURES = 121
PADDED_FEATURES = 128   # 121 -> 128: aligned (8,128) tiles and aligned DMA
HIDDEN = 256


def _round_up(n: int, m: int) -> int:
    return ((n + m - 1) // m) * m


def bandit_kernel(x_ref, w1_ref, b1_ref, w3_ref, b3_ref, w2_ref, b2_ref, o_ref):
    # Fused MLP tile: (TB,128)@(128,256) -> relu -> @(256,256) -> relu
    # -> @(256,1) + b2 -> sigmoid.  bf16 matmuls, f32 accumulation.
    x = x_ref[...]                                                     # (TB,128) bf16

    h1 = jnp.dot(x, w1_ref[...], preferred_element_type=jnp.float32) + b1_ref[...]
    h1 = jnp.maximum(h1, 0.0)
    # TODO(synk): dropout1 (p=0.1) is identity in inference; training-mode RNG
    # masking is not implemented here.

    h2 = jnp.dot(h1.astype(jnp.bfloat16), w3_ref[...],
                 preferred_element_type=jnp.float32) + b3_ref[...]
    h2 = jnp.maximum(h2, 0.0)
    # TODO(synk): dropout2 (p=0.1) is identity in inference.

    logits = jnp.dot(h2.astype(jnp.bfloat16), w2_ref[...],
                     preferred_element_type=jnp.float32) + b2_ref[0]   # scalar (SMEM)
    o_ref[...] = jax.nn.sigmoid(logits)


def prepare_params(params):
    """One-time weight prep: cast matmul weights to bf16 (f32 accumulation is
    done in-kernel) and zero-pad w1's input dim 121 -> 128."""
    w1 = jnp.pad(params["w1"].astype(jnp.bfloat16),
                 ((0, PADDED_FEATURES - IN_FEATURES), (0, 0)))         # (128,256)
    return {
        "w1": w1,
        "b1": params["b1"].astype(jnp.float32).reshape(1, HIDDEN),
        "w3": params["w3"].astype(jnp.bfloat16),                       # (256,256)
        "b3": params["b3"].astype(jnp.float32).reshape(1, HIDDEN),
        "w2": params["w2"].astype(jnp.bfloat16),                       # (256,1)
        "b2": params["b2"].astype(jnp.float32).reshape(1),             # (1,) -> SMEM
    }


def contextual_neural_bandit(x, prepared, *, max_batch_tile=512):
    """Forward pass of ContextualNeuralBandit as a batch-tiled Pallas TPU kernel.

    x: (B, 121) float32
    prepared: output of prepare_params()
    returns: (B, 1) float32 in (0, 1)
    """
    B = x.shape[0]
    # Batch tile: multiple of 256 so the MXU M dimension is filled on v6e/v7x,
    # capped at 512 to stay well inside the v5e 16 MiB scoped VMEM default.
    TB = min(max_batch_tile, _round_up(B, 256))
    B_pad = _round_up(B, TB)
    num_tiles = B_pad // TB

    xp = jnp.pad(x.astype(jnp.bfloat16),
                 ((0, B_pad - B), (0, PADDED_FEATURES - IN_FEATURES)))

    w1, b1 = prepared["w1"], prepared["b1"]
    w3, b3 = prepared["w3"], prepared["b3"]
    w2, b2 = prepared["w2"], prepared["b2"]

    # Weights/biases use constant index_maps so they are fetched once and stay
    # VMEM-resident across the batch grid; x and the output are tiled over B.
    def const(shape):
        return pl.BlockSpec(shape, lambda i: tuple(0 for _ in shape))

    flops = 2 * B_pad * (PADDED_FEATURES * HIDDEN + HIDDEN * HIDDEN + HIDDEN)
    bytes_accessed = (
        B_pad * PADDED_FEATURES * 2                                     # x (bf16)
        + (PADDED_FEATURES * HIDDEN + HIDDEN * HIDDEN + HIDDEN) * 2     # weights
        + (2 * HIDDEN + 1) * 4                                          # biases
        + B_pad * 4                                                     # output
    )

    out = pl.pallas_call(
        bandit_kernel,
        out_shape=jax.ShapeDtypeStruct((B_pad, 1), jnp.float32),
        grid_spec=pltpu.PrefetchScalarGridSpec(
            num_scalar_prefetch=0,
            grid=(num_tiles,),
            in_specs=[
                pl.BlockSpec((TB, PADDED_FEATURES), lambda i: (i, 0)),  # x tile
                const(w1.shape),
                const(b1.shape),
                const(w3.shape),
                const(b3.shape),
                const(w2.shape),
                pl.BlockSpec(memory_space=pltpu.MemorySpace.SMEM),      # b2 scalar
            ],
            out_specs=pl.BlockSpec((TB, 1), lambda i: (i, 0)),
        ),
        compiler_params=pltpu.CompilerParams(
            dimension_semantics=("parallel",),  # both TCs on v7x; no-op elsewhere
        ),
        cost_estimate=pl.CostEstimate(
            flops=flops, transcendentals=B_pad, bytes_accessed=bytes_accessed),
    )(xp, w1, b1, w3, b3, w2, b2)

    return out[:B]


def init_params(key):
    """Deterministic parameter init matching the nn.Linear shapes
    (stored transposed: (in, out)), PyTorch-default U(-1/sqrt(fan_in), ...)."""
    k1, k2, k3, k4, k5, k6 = jax.random.split(key, 6)

    def uniform_like_torch(k, shape, fan_in):
        bound = 1.0 / jnp.sqrt(jnp.float32(fan_in))
        return jax.random.uniform(k, shape, jnp.float32, -bound, bound)

    return {
        "w1": uniform_like_torch(k1, (IN_FEATURES, HIDDEN), IN_FEATURES),
        "b1": uniform_like_torch(k2, (1, HIDDEN), IN_FEATURES),
        "w3": uniform_like_torch(k3, (HIDDEN, HIDDEN), HIDDEN),
        "b3": uniform_like_torch(k4, (1, HIDDEN), HIDDEN),
        "w2": uniform_like_torch(k5, (HIDDEN, 1), HIDDEN),
        "b2": uniform_like_torch(k6, (1, 1), HIDDEN),
    }


def reference_forward(x, params):
    """Pure-JAX reference mirroring the kernel's bf16-matmul / f32-accumulate
    numerics."""
    w1 = params["w1"].astype(jnp.bfloat16)
    w3 = params["w3"].astype(jnp.bfloat16)
    w2 = params["w2"].astype(jnp.bfloat16)
    h1 = jnp.maximum(
        jnp.dot(x.astype(jnp.bfloat16), w1, preferred_element_type=jnp.float32)
        + params["b1"], 0.0)
    h2 = jnp.maximum(
        jnp.dot(h1.astype(jnp.bfloat16), w3, preferred_element_type=jnp.float32)
        + params["b3"], 0.0)
    logits = jnp.dot(h2.astype(jnp.bfloat16), w2,
                     preferred_element_type=jnp.float32) + params["b2"]
    return jax.nn.sigmoid(logits)


if __name__ == "__main__":
    key = jax.random.PRNGKey(0)
    k_params, k_x1, k_x2 = jax.random.split(key, 3)

    params = init_params(k_params)
    prepared = prepare_params(params)
    forward = jax.jit(
        functools.partial(contextual_neural_bandit, prepared=prepared))

    # Small batch (single tile).
    x_small = jax.random.normal(k_x1, (8, IN_FEATURES), jnp.float32)
    out_small = jax.block_until_ready(forward(x_small))
    ref_small = reference_forward(x_small, params)
    assert out_small.shape == (8, 1)
    assert jnp.allclose(out_small, ref_small, atol=2e-3, rtol=2e-3), \
        "mismatch vs reference (small batch)"

    # Ragged batch exercising multiple grid tiles + batch padding.
    x_big = jax.random.normal(k_x2, (600, IN_FEATURES), jnp.float32)
    out_big = jax.block_until_ready(forward(x_big))
    ref_big = reference_forward(x_big, params)
    assert out_big.shape == (600, 1)
    assert jnp.allclose(out_big, ref_big, atol=2e-3, rtol=2e-3), \
        "mismatch vs reference (multi-tile batch)"

    print("KERNEL_OK")
</pallas_src>

<mosaic_0001>
module attributes {stable_mosaic.version = 11 : i64} {
  func.func @bandit_kernel(%arg0: i32, %arg1: memref<256x128xbf16, #tpu.memory_space<vmem>>, %arg2: memref<128x256xbf16, #tpu.memory_space<vmem>>, %arg3: memref<1x256xf32, #tpu.memory_space<vmem>>, %arg4: memref<256x256xbf16, #tpu.memory_space<vmem>>, %arg5: memref<1x256xf32, #tpu.memory_space<vmem>>, %arg6: memref<256x1xbf16, #tpu.memory_space<vmem>>, %arg7: memref<1xf32, #tpu.memory_space<smem>>, %arg8: memref<256x1xf32, #tpu.memory_space<vmem>>) attributes {dimension_semantics = [#tpu.dimension_semantics<parallel>], iteration_bounds = array<i64: 1>, scalar_prefetch = 0 : i64, scratch_operands = 0 : i64, tpu.core_type = #tpu.core_type<tc>, window_params = [{transform_indices = @transform_0, window_bounds = array<i64: 256, 128>}, {pipeline_mode = #tpu.pipeline_mode<synchronous>, transform_indices = @transform_1, window_bounds = array<i64: 128, 256>}, {pipeline_mode = #tpu.pipeline_mode<synchronous>, transform_indices = @transform_2, window_bounds = array<i64: 1, 256>}, {pipeline_mode = #tpu.pipeline_mode<synchronous>, transform_indices = @transform_3, window_bounds = array<i64: 256, 256>}, {pipeline_mode = #tpu.pipeline_mode<synchronous>, transform_indices = @transform_4, window_bounds = array<i64: 1, 256>}, {pipeline_mode = #tpu.pipeline_mode<synchronous>, transform_indices = @transform_5, window_bounds = array<i64: 256, 1>}, {transform_indices = @transform_6, window_bounds = array<i64: 1>}, {transform_indices = @transform_7, window_bounds = array<i64: 256, 1>}]} {
    %c0 = arith.constant 0 : index
    %c0_0 = arith.constant 0 : index
    %0 = vector.load %arg1[%c0, %c0_0] : memref<256x128xbf16, #tpu.memory_space<vmem>>, vector<256x128xbf16>
    %c0_1 = arith.constant 0 : index
    %c0_2 = arith.constant 0 : index
    %1 = vector.load %arg2[%c0_1, %c0_2] : memref<128x256xbf16, #tpu.memory_space<vmem>>, vector<128x256xbf16>
    %cst = arith.constant dense<0.000000e+00> : vector<256x256xf32>
    %2 = tpu.matmul %0, %1, %cst {dimension_numbers = #tpu.dot_dimension_numbers<[1], [0], [0], [1], [0, 0, 1, 1], [], []>} : vector<256x128xbf16>, vector<128x256xbf16>, vector<256x256xf32> -> vector<256x256xf32>
    %c0_3 = arith.constant 0 : index
    %c0_4 = arith.constant 0 : index
    %3 = vector.load %arg3[%c0_3, %c0_4] : memref<1x256xf32, #tpu.memory_space<vmem>>, vector<1x256xf32>
    %4 = vector.broadcast %3 : vector<1x256xf32> to vector<256x256xf32>
    %5 = arith.addf %2, %4 : vector<256x256xf32>
    %cst_5 = arith.constant 0.000000e+00 : f32
    %6 = vector.broadcast %cst_5 : f32 to vector<256x256xf32>
    %7 = arith.maximumf %5, %6 : vector<256x256xf32>
    %8 = arith.truncf %7 : vector<256x256xf32> to vector<256x256xbf16>
    %c0_6 = arith.constant 0 : index
    %c0_7 = arith.constant 0 : index
    %9 = vector.load %arg4[%c0_6, %c0_7] : memref<256x256xbf16, #tpu.memory_space<vmem>>, vector<256x256xbf16>
    %cst_8 = arith.constant dense<0.000000e+00> : vector<256x256xf32>
    %10 = tpu.matmul %8, %9, %cst_8 {dimension_numbers = #tpu.dot_dimension_numbers<[1], [0], [0], [1], [0, 0, 1, 1], [], []>} : vector<256x256xbf16>, vector<256x256xbf16>, vector<256x256xf32> -> vector<256x256xf32>
    %c0_9 = arith.constant 0 : index
    %c0_10 = arith.constant 0 : index
    %11 = vector.load %arg5[%c0_9, %c0_10] : memref<1x256xf32, #tpu.memory_space<vmem>>, vector<1x256xf32>
    %12 = vector.broadcast %11 : vector<1x256xf32> to vector<256x256xf32>
    %13 = arith.addf %10, %12 : vector<256x256xf32>
    %cst_11 = arith.constant 0.000000e+00 : f32
    %14 = vector.broadcast %cst_11 : f32 to vector<256x256xf32>
    %15 = arith.maximumf %13, %14 : vector<256x256xf32>
    %16 = arith.truncf %15 : vector<256x256xf32> to vector<256x256xbf16>
    %c0_12 = arith.constant 0 : index
    %c0_13 = arith.constant 0 : index
    %17 = vector.load %arg6[%c0_12, %c0_13] : memref<256x1xbf16, #tpu.memory_space<vmem>>, vector<256x1xbf16>
    %cst_14 = arith.constant dense<0.000000e+00> : vector<256x1xf32>
    %18 = tpu.matmul %16, %17, %cst_14 {dimension_numbers = #tpu.dot_dimension_numbers<[1], [0], [0], [1], [0, 0, 1, 1], [], []>} : vector<256x256xbf16>, vector<256x1xbf16>, vector<256x1xf32> -> vector<256x1xf32>
    %c0_15 = arith.constant 0 : index
    %19 = memref.load %arg7[%c0_15] : memref<1xf32, #tpu.memory_space<smem>>
    %20 = vector.broadcast %19 : f32 to vector<256x1xf32>
    %21 = arith.addf %18, %20 : vector<256x1xf32>
    %22 = arith.negf %21 : vector<256x1xf32>
    %23 = math.exp %22 : vector<256x1xf32>
    %cst_16 = arith.constant 1.000000e+00 : f32
    %24 = vector.broadcast %cst_16 : f32 to vector<256x1xf32>
    %25 = arith.addf %24, %23 : vector<256x1xf32>
    %26 = arith.divf %24, %25 : vector<256x1xf32>
    %c0_17 = arith.constant 0 : index
    %c0_18 = arith.constant 0 : index
    %27 = vector.load %arg8[%c0_17, %c0_18] : memref<256x1xf32, #tpu.memory_space<vmem>>, vector<256x1xf32>
    tpu.vector_store %arg8[%c0_17, %c0_18], %26 {strides = array<i32>} : memref<256x1xf32, #tpu.memory_space<vmem>>, vector<256x1xf32>,
    return
  }
  func.func @transform_0(%arg0: i32) -> (i32, i32) {
    %c0_i32 = arith.constant 0 : i32
    %c0_i32_0 = arith.constant 0 : i32
    return %arg0, %c0_i32 : i32, i32
  }
  func.func @transform_1(%arg0: i32) -> (i32, i32) {
    %c0_i32 = arith.constant 0 : i32
    %c0_i32_0 = arith.constant 0 : i32
    %c0_i32_1 = arith.constant 0 : i32
    return %c0_i32, %c0_i32_0 : i32, i32
  }
  func.func @transform_2(%arg0: i32) -> (i32, i32) {
    %c0_i32 = arith.constant 0 : i32
    %c0_i32_0 = arith.constant 0 : i32
    %c0_i32_1 = arith.constant 0 : i32
    return %c0_i32, %c0_i32_0 : i32, i32
  }
  func.func @transform_3(%arg0: i32) -> (i32, i32) {
    %c0_i32 = arith.constant 0 : i32
    %c0_i32_0 = arith.constant 0 : i32
    %c0_i32_1 = arith.constant 0 : i32
    return %c0_i32, %c0_i32_0 : i32, i32
  }
  func.func @transform_4(%arg0: i32) -> (i32, i32) {
    %c0_i32 = arith.constant 0 : i32
    %c0_i32_0 = arith.constant 0 : i32
    %c0_i32_1 = arith.constant 0 : i32
    return %c0_i32, %c0_i32_0 : i32, i32
  }
  func.func @transform_5(%arg0: i32) -> (i32, i32) {
    %c0_i32 = arith.constant 0 : i32
    %c0_i32_0 = arith.constant 0 : i32
    %c0_i32_1 = arith.constant 0 : i32
    return %c0_i32, %c0_i32_0 : i32, i32
  }
  func.func @transform_6(%arg0: i32) -> i32 {
    %c0_i32 = arith.constant 0 : i32
    %c0_i32_0 = arith.constant 0 : i32
    return %c0_i32 : i32
  }
  func.func @transform_7(%arg0: i32) -> (i32, i32) {
    %c0_i32 = arith.constant 0 : i32
    %c0_i32_0 = arith.constant 0 : i32
    return %arg0, %c0_i32 : i32, i32
  }
}

</mosaic_0001>

<llo_original>
// kernel: contextual_neural_bandit.1
$region0: #{contextual_neural_bandit.1}
  #allocation0 [shape = 'u32[]', space=smem, size = 0x4, offset = 0x4, fixed_abs, tag = 'smem constant byte address 0x4 - core index']
  #allocation1 [shape = 'u32[144,128]{1,0:T(1,128)}', space=vmem, size = 0x12000, scoped, tag = 'internal scratch']
  #allocation2 [shape = 'f32[1]{0:T(128)S(6)}', space=smem, size = 0x200, scoped, tag = 'scoped memory for contextual_neural_bandit.1']
  %s0 = inlined_call_operand.vmem [shape: bf16[256,128], index: 0, kind: input, shape index: {}]
  %s1 = inlined_call_operand.vmem [shape: bf16[128,256], index: 1, kind: input, shape index: {}]
  %s2 = inlined_call_operand.vmem [shape: f32[1,256], index: 2, kind: input, shape index: {}]
  %s3 = inlined_call_operand.vmem [shape: bf16[256,256], index: 3, kind: input, shape index: {}]
  %s4 = inlined_call_operand.vmem [shape: f32[1,256], index: 4, kind: input, shape index: {}]
  %s5 = inlined_call_operand.vmem [shape: bf16[256,1], index: 5, kind: input, shape index: {}]
  %s6 = inlined_call_operand.<no memory space> [shape: f32[1], index: 6, kind: input, shape index: {}]
  %s7 = inlined_call_operand.vmem [shape: f32[256,1], index: 7, kind: output, shape index: {}]
  %s8 = sld [smem:[#allocation0]]
  $region38: #{contextual_neural_bandit.1} parent=0
    _
  %s10 = ssub.s32 1, %s8
  %s11 = scalar_select 0, %s10, %s8
  %12 = sst [smem:[#allocation2]] %s6
  // Predicated region
  $region2: #{contextual_neural_bandit.1} parent=0 // pred_check
    _
  $region3: #{contextual_neural_bandit.1} parent=0 // pred_check_branch
    %14 = sbr.rel (0) target = $region5
  $region4: #{contextual_neural_bandit.1} parent=0 // pred_region
    _
  $region5: #{contextual_neural_bandit.1} parent=0 // pred_fallthru
    _
  // Predicated region
  $region6: #{contextual_neural_bandit.1} parent=0 // pred_check
    _
  $region7: #{contextual_neural_bandit.1} parent=0 // pred_check_branch
    %16 = sbr.rel (0) target = $region9
  $region8: #{contextual_neural_bandit.1} parent=0 // pred_region
    _
  $region9: #{contextual_neural_bandit.1} parent=0 // pred_fallthru
    _
  // Predicated region
  $region10: #{contextual_neural_bandit.1} parent=0 // pred_check
    _
  $region11: #{contextual_neural_bandit.1} parent=0 // pred_check_branch
    %18 = sbr.rel (0) target = $region13
  $region12: #{contextual_neural_bandit.1} parent=0 // pred_region
    _
  $region13: #{contextual_neural_bandit.1} parent=0 // pred_fallthru
    _
  // Predicated region
  $region14: #{contextual_neural_bandit.1} parent=0 // pred_check
    _
  $region15: #{contextual_neural_bandit.1} parent=0 // pred_check_branch
    %20 = sbr.rel (0) target = $region17
  $region16: #{contextual_neural_bandit.1} parent=0 // pred_region
    _
  $region17: #{contextual_neural_bandit.1} parent=0 // pred_fallthru
    _
  // Predicated region
  $region18: #{contextual_neural_bandit.1} parent=0 // pred_check
    _
  $region19: #{contextual_neural_bandit.1} parent=0 // pred_check_branch
    %22 = sbr.rel (0) target = $region21
  $region20: #{contextual_neural_bandit.1} parent=0 // pred_region
    _
  $region21: #{contextual_neural_bandit.1} parent=0 // pred_fallthru
    _
  // Predicated region
  $region22: #{contextual_neural_bandit.1} parent=0 // pred_check
    _
  $region23: #{contextual_neural_bandit.1} parent=0 // pred_check_branch
    %24 = sbr.rel (0) target = $region25
  $region24: #{contextual_neural_bandit.1} parent=0 // pred_region
    _
  $region25: #{contextual_neural_bandit.1} parent=0 // pred_fallthru
    _
  // Predicated region
  $region26: #{contextual_neural_bandit.1} parent=0 // pred_check
    _
  $region27: #{contextual_neural_bandit.1} parent=0 // pred_check_branch
    %26 = sbr.rel (0) target = $region29
  $region28: #{contextual_neural_bandit.1} parent=0 // pred_region
    _
  $region29: #{contextual_neural_bandit.1} parent=0 // pred_fallthru
    _
  %v28 = vld [vmem:[%s0] sm:$0xf]
  %v29 = vld [vmem:[%s0 + $0x4] sm:$0xf]
  %v30 = vld [vmem:[%s0 + $0x8] sm:$0xf]
  %v31 = vld [vmem:[%s0 + $0xc] sm:$0xf]
  %v32 = vld [vmem:[%s0 + $0x10] sm:$0xf]
  %v33 = vld [vmem:[%s0 + $0x14] sm:$0xf]
  %v34 = vld [vmem:[%s0 + $0x18] sm:$0xf]
  %v35 = vld [vmem:[%s0 + $0x1c] sm:$0xf]
  %v36 = vld [vmem:[%s0 + $0x20] sm:$0xf]
  %v37 = vld [vmem:[%s0 + $0x24] sm:$0xf]
  %v38 = vld [vmem:[%s0 + $0x28] sm:$0xf]
  %v39 = vld [vmem:[%s0 + $0x2c] sm:$0xf]
  %v40 = vld [vmem:[%s0 + $0x30] sm:$0xf]
  %v41 = vld [vmem:[%s0 + $0x34] sm:$0xf]
  %v42 = vld [vmem:[%s0 + $0x38] sm:$0xf]
  %v43 = vld [vmem:[%s0 + $0x3c] sm:$0xf]
  %v44 = vld [vmem:[%s0 + $0x40] sm:$0xf]
  %v45 = vld [vmem:[%s0 + $0x44] sm:$0xf]
  %v46 = vld [vmem:[%s0 + $0x48] sm:$0xf]
  %v47 = vld [vmem:[%s0 + $0x4c] sm:$0xf]
  %v48 = vld [vmem:[%s0 + $0x50] sm:$0xf]
  %v49 = vld [vmem:[%s0 + $0x54] sm:$0xf]
  %v50 = vld [vmem:[%s0 + $0x58] sm:$0xf]
  %v51 = vld [vmem:[%s0 + $0x5c] sm:$0xf]
  %v52 = vld [vmem:[%s0 + $0x60] sm:$0xf]
  %v53 = vld [vmem:[%s0 + $0x64] sm:$0xf]
  %v54 = vld [vmem:[%s0 + $0x68] sm:$0xf]
  %v55 = vld [vmem:[%s0 + $0x6c] sm:$0xf]
  %v56 = vld [vmem:[%s0 + $0x70] sm:$0xf]
  %v57 = vld [vmem:[%s0 + $0x74] sm:$0xf]
  %v58 = vld [vmem:[%s0 + $0x78] sm:$0xf]
  %v59 = vld [vmem:[%s0 + $0x7c] sm:$0xf]
  %v60 = vld [vmem:[%s1] sm:$0xff]
  %v61 = vld [vmem:[%s1 + $0x8] sm:$0xff]
  %v62 = vld [vmem:[%s1 + $0x10] sm:$0xff]
  %v63 = vld [vmem:[%s1 + $0x18] sm:$0xff]
  %v64 = vld [vmem:[%s1 + $0x20] sm:$0xff]
  %v65 = vld [vmem:[%s1 + $0x28] sm:$0xff]
  %v66 = vld [vmem:[%s1 + $0x30] sm:$0xff]
  %v67 = vld [vmem:[%s1 + $0x38] sm:$0xff]
  %v68 = vld [vmem:[%s1 + $0x40] sm:$0xff]
  %v69 = vld [vmem:[%s1 + $0x48] sm:$0xff]
  %v70 = vld [vmem:[%s1 + $0x50] sm:$0xff]
  %v71 = vld [vmem:[%s1 + $0x58] sm:$0xff]
  %v72 = vld [vmem:[%s1 + $0x60] sm:$0xff]
  %v73 = vld [vmem:[%s1 + $0x68] sm:$0xff]
  %v74 = vld [vmem:[%s1 + $0x70] sm:$0xff]
  %v75 = vld [vmem:[%s1 + $0x78] sm:$0xff]
  %v76 = vld [vmem:[%s2] sm:$0x3]
  %v78 = vlaneseq
  %v79 = vshrl.u32 %v78, 7
  %v80 = vsub.s32 0, %v79
  %v81 = vrot.slane %v76, %v80
  %v82 = vlaneseq
  %v83 = vshrl.u32 %v82, 7
  %v84 = vsub.s32 1, %v83
  %v85 = vrot.slane %v76, %v84
  %v120 = vunpack.c.l.b16 %v28
  %v121 = vunpack.c.l.b16 %v29
  %v122 = vunpack.c.l.b16 %v30
  %v123 = vunpack.c.l.b16 %v31
  %v124 = vunpack.c.l.b16 %v32
  %v125 = vunpack.c.l.b16 %v33
  %v126 = vunpack.c.l.b16 %v34
  %v127 = vunpack.c.l.b16 %v35
  %v128 = vunpack.c.l.b16 %v36
  %v129 = vunpack.c.l.b16 %v37
  %v130 = vunpack.c.l.b16 %v38
  %v131 = vunpack.c.l.b16 %v39
  %v132 = vunpack.c.l.b16 %v40
  %v133 = vunpack.c.l.b16 %v41
  %v134 = vunpack.c.l.b16 %v42
  %v135 = vunpack.c.l.b16 %v43
  %v136 = vunpack.c.l.b16 %v44
  %v137 = vunpack.c.l.b16 %v45
  %v138 = vunpack.c.l.b16 %v46
  %v139 = vunpack.c.l.b16 %v47
  %v140 = vunpack.c.l.b16 %v48
  %v141 = vunpack.c.l.b16 %v49
  %v142 = vunpack.c.l.b16 %v50
  %v143 = vunpack.c.l.b16 %v51
  %v144 = vunpack.c.l.b16 %v52
  %v145 = vunpack.c.l.b16 %v53
  %v146 = vunpack.c.l.b16 %v54
  %v147 = vunpack.c.l.b16 %v55
  %v148 = vunpack.c.l.b16 %v56
  %v149 = vunpack.c.l.b16 %v57
  %v150 = vunpack.c.l.b16 %v58
  %v151 = vunpack.c.l.b16 %v59
  %v152 = vpack.c.b16 %v121, %v120
  %v153 = vpack.c.b16 %v123, %v122
  %v154 = vpack.c.b16 %v125, %v124
  %v155 = vpack.c.b16 %v127, %v126
  %v156 = vpack.c.b16 %v129, %v128
  %v157 = vpack.c.b16 %v131, %v130
  %v158 = vpack.c.b16 %v133, %v132
  %v159 = vpack.c.b16 %v135, %v134
  %v160 = vpack.c.b16 %v137, %v136
  %v161 = vpack.c.b16 %v139, %v138
  %v162 = vpack.c.b16 %v141, %v140
  %v163 = vpack.c.b16 %v143, %v142
  %v164 = vpack.c.b16 %v145, %v144
  %v165 = vpack.c.b16 %v147, %v146
  %v166 = vpack.c.b16 %v149, %v148
  %v167 = vpack.c.b16 %v151, %v150
  %v200 = vunpack.c.l.b16 %v60
  %v201 = vunpack.c.h.b16 %v60
  %v202 = vunpack.c.l.b16 %v61
  %v203 = vunpack.c.h.b16 %v61
  %v204 = vunpack.c.l.b16 %v62
  %v205 = vunpack.c.h.b16 %v62
  %v206 = vunpack.c.l.b16 %v63
  %v207 = vunpack.c.h.b16 %v63
  %v208 = vunpack.c.l.b16 %v64
  %v209 = vunpack.c.h.b16 %v64
  %v210 = vunpack.c.l.b16 %v65
  %v211 = vunpack.c.h.b16 %v65
  %v212 = vunpack.c.l.b16 %v66
  %v213 = vunpack.c.h.b16 %v66
  %v214 = vunpack.c.l.b16 %v67
  %v215 = vunpack.c.h.b16 %v67
  %v216 = vunpack.c.l.b16 %v68
  %v217 = vunpack.c.h.b16 %v68
  %v218 = vunpack.c.l.b16 %v69
  %v219 = vunpack.c.h.b16 %v69
  %v220 = vunpack.c.l.b16 %v70
  %v221 = vunpack.c.h.b16 %v70
  %v222 = vunpack.c.l.b16 %v71
  %v223 = vunpack.c.h.b16 %v71
  %v224 = vunpack.c.l.b16 %v72
  %v225 = vunpack.c.h.b16 %v72
  %v226 = vunpack.c.l.b16 %v73
  %v227 = vunpack.c.h.b16 %v73
  %v228 = vunpack.c.l.b16 %v74
  %v229 = vunpack.c.h.b16 %v74
  %v230 = vunpack.c.l.b16 %v75
  %v231 = vunpack.c.h.b16 %v75
  %v232 = vpack.c.b16 %v202, %v200
  %v233 = vpack.c.b16 %v203, %v201
  %v234 = vpack.c.b16 %v206, %v204
  %v235 = vpack.c.b16 %v207, %v205
  %v236 = vpack.c.b16 %v210, %v208
  %v237 = vpack.c.b16 %v211, %v209
  %v238 = vpack.c.b16 %v214, %v212
  %v239 = vpack.c.b16 %v215, %v213
  %v240 = vpack.c.b16 %v218, %v216
  %v241 = vpack.c.b16 %v219, %v217
  %v242 = vpack.c.b16 %v222, %v220
  %v243 = vpack.c.b16 %v223, %v221
  %v244 = vpack.c.b16 %v226, %v224
  %v245 = vpack.c.b16 %v227, %v225
  %v246 = vpack.c.b16 %v230, %v228
  %v247 = vpack.c.b16 %v231, %v229
  %264 = vmatprep.subr.bf16.mxu0 %v233
  %265 = vmatpush1.bf16.msra.mxu0 %v232
  %266 = vmatprep.subr.bf16.mxu0 %v235
  %267 = vmatpush1.bf16.msra.mxu0 %v234
  %268 = vmatprep.subr.bf16.mxu0 %v237
  %269 = vmatpush1.bf16.msra.mxu0 %v236
  %270 = vmatprep.subr.bf16.mxu0 %v239
  %271 = vmatpush1.bf16.msra.mxu0 %v238
  %272 = vmatprep.subr.bf16.mxu0 %v241
  %273 = vmatpush1.bf16.msra.mxu0 %v240
  %274 = vmatprep.subr.bf16.mxu0 %v243
  %275 = vmatpush1.bf16.msra.mxu0 %v242
  %276 = vmatprep.subr.bf16.mxu0 %v245
  %277 = vmatpush1.bf16.msra.mxu0 %v244
  %278 = vmatprep.subr.bf16.mxu0 %v247
  %279 = vmatpush1.bf16.msra.mxu0 %v246
  %280 = vmatprep.subr.bf16.mxu0 0
  %281 = vmatpush1.bf16.msra.mxu0 0
  %282 = vmatprep.subr.bf16.mxu0 0
  %283 = vmatpush1.bf16.msra.mxu0 0
  %284 = vmatprep.subr.bf16.mxu0 0
  %285 = vmatpush1.bf16.msra.mxu0 0
  %286 = vmatprep.subr.bf16.mxu0 0
  %287 = vmatpush1.bf16.msra.mxu0 0
  %288 = vmatprep.subr.bf16.mxu0 0
  %289 = vmatpush1.bf16.msra.mxu0 0
  %290 = vmatprep.subr.bf16.mxu0 0
  %291 = vmatpush1.bf16.msra.mxu0 0
  %292 = vmatprep.subr.bf16.mxu0 0
  %293 = vmatpush1.bf16.msra.mxu0 0
  %294 = vmatprep.subr.bf16.mxu0 0
  %295 = vmatpush1.bf16.msra.mxu0 0
  %296 = vmatprep.mubr.bf16.mxu0 0
  %297 = vmatmul.mubr.bf16.gmra.mrb[0].mxu0 %v152
  %v298 = vpop.f32.mrb[0].mxu0
  %v299 = vadd.f32 %v81, %v298
  %v300 = vpop.f32.mrb[0].mxu0
  %v301 = vadd.f32 %v85, %v300
  %v302 = vpop.f32.mrb[0].mxu0
  %v303 = vadd.f32 %v81, %v302
  %v304 = vpop.f32.mrb[0].mxu0
  %v305 = vadd.f32 %v85, %v304
  %306 = vmatprep.mubr.bf16.mxu0 0
  %307 = vmatmul.mubr.bf16.gmra.mrb[0].mxu0 %v153
  %v308 = vpop.f32.mrb[0].mxu0
  %v309 = vadd.f32 %v81, %v308
  %v310 = vpop.f32.mrb[0].mxu0
  %v311 = vadd.f32 %v85, %v310
  %v312 = vpop.f32.mrb[0].mxu0
  %v313 = vadd.f32 %v81, %v312
  %v314 = vpop.f32.mrb[0].mxu0
  %v315 = vadd.f32 %v85, %v314
  %316 = vmatprep.mubr.bf16.mxu0 0
  %317 = vmatmul.mubr.bf16.gmra.mrb[0].mxu0 %v154
  %v318 = vpop.f32.mrb[0].mxu0
  %v319 = vadd.f32 %v81, %v318
  %v320 = vpop.f32.mrb[0].mxu0
  %v321 = vadd.f32 %v85, %v320
  %v322 = vpop.f32.mrb[0].mxu0
  %v323 = vadd.f32 %v81, %v322
  %v324 = vpop.f32.mrb[0].mxu0
  %v325 = vadd.f32 %v85, %v324
  %326 = vmatprep.mubr.bf16.mxu0 0
  %327 = vmatmul.mubr.bf16.gmra.mrb[0].mxu0 %v155
  %v328 = vpop.f32.mrb[0].mxu0
  %v329 = vadd.f32 %v81, %v328
  %v330 = vpop.f32.mrb[0].mxu0
  %v331 = vadd.f32 %v85, %v330
  %v332 = vpop.f32.mrb[0].mxu0
  %v333 = vadd.f32 %v81, %v332
  %v334 = vpop.f32.mrb[0].mxu0
  %v335 = vadd.f32 %v85, %v334
  %336 = vmatprep.mubr.bf16.mxu0 0
  %337 = vmatmul.mubr.bf16.gmra.mrb[0].mxu0 %v156
  %v338 = vpop.f32.mrb[0].mxu0
  %v339 = vadd.f32 %v81, %v338
  %v340 = vpop.f32.mrb[0].mxu0
  %v341 = vadd.f32 %v85, %v340
  %v342 = vpop.f32.mrb[0].mxu0
  %v343 = vadd.f32 %v81, %v342
  %v344 = vpop.f32.mrb[0].mxu0
  %v345 = vadd.f32 %v85, %v344
  %346 = vmatprep.mubr.bf16.mxu0 0
  %347 = vmatmul.mubr.bf16.gmra.mrb[0].mxu0 %v157
  %v348 = vpop.f32.mrb[0].mxu0
  %v349 = vadd.f32 %v81, %v348
  %v350 = vpop.f32.mrb[0].mxu0
  %v351 = vadd.f32 %v85, %v350
  %v352 = vpop.f32.mrb[0].mxu0
  %v353 = vadd.f32 %v81, %v352
  %v354 = vpop.f32.mrb[0].mxu0
  %v355 = vadd.f32 %v85, %v354
  %356 = vmatprep.mubr.bf16.mxu0 0
  %357 = vmatmul.mubr.bf16.gmra.mrb[0].mxu0 %v158
  %v358 = vpop.f32.mrb[0].mxu0
  %v359 = vadd.f32 %v81, %v358
  %v360 = vpop.f32.mrb[0].mxu0
  %v361 = vadd.f32 %v85, %v360
  %v362 = vpop.f32.mrb[0].mxu0
  %v363 = vadd.f32 %v81, %v362
  %v364 = vpop.f32.mrb[0].mxu0
  %v365 = vadd.f32 %v85, %v364
  %366 = vmatprep.mubr.bf16.mxu0 0
  %367 = vmatmul.mubr.bf16.gmra.mrb[0].mxu0 %v159
  %v368 = vpop.f32.mrb[0].mxu0
  %v369 = vadd.f32 %v81, %v368
  %v370 = vpop.f32.mrb[0].mxu0
  %v371 = vadd.f32 %v85, %v370
  %v372 = vpop.f32.mrb[0].mxu0
  %v373 = vadd.f32 %v81, %v372
  %v374 = vpop.f32.mrb[0].mxu0
  %v375 = vadd.f32 %v85, %v374
  %376 = vmatprep.mubr.bf16.mxu0 0
  %377 = vmatmul.mubr.bf16.gmra.mrb[0].mxu0 %v160
  %v378 = vpop.f32.mrb[0].mxu0
  %v379 = vadd.f32 %v81, %v378
  %v380 = vpop.f32.mrb[0].mxu0
  %v381 = vadd.f32 %v85, %v380
  %v382 = vpop.f32.mrb[0].mxu0
  %v383 = vadd.f32 %v81, %v382
  %v384 = vpop.f32.mrb[0].mxu0
  %v385 = vadd.f32 %v85, %v384
  %386 = vmatprep.mubr.bf16.mxu0 0
  %387 = vmatmul.mubr.bf16.gmra.mrb[0].mxu0 %v161
  %v388 = vpop.f32.mrb[0].mxu0
  %v389 = vadd.f32 %v81, %v388
  %v390 = vpop.f32.mrb[0].mxu0
  %v391 = vadd.f32 %v85, %v390
  %v392 = vpop.f32.mrb[0].mxu0
  %v393 = vadd.f32 %v81, %v392
  %v394 = vpop.f32.mrb[0].mxu0
  %v395 = vadd.f32 %v85, %v394
  %396 = vmatprep.mubr.bf16.mxu0 0
  %397 = vmatmul.mubr.bf16.gmra.mrb[0].mxu0 %v162
  %v398 = vpop.f32.mrb[0].mxu0
  %v399 = vadd.f32 %v81, %v398
  %v400 = vpop.f32.mrb[0].mxu0
  %v401 = vadd.f32 %v85, %v400
  %v402 = vpop.f32.mrb[0].mxu0
  %v403 = vadd.f32 %v81, %v402
  %v404 = vpop.f32.mrb[0].mxu0
  %v405 = vadd.f32 %v85, %v404
  %406 = vmatprep.mubr.bf16.mxu0 0
  %407 = vmatmul.mubr.bf16.gmra.mrb[0].mxu0 %v163
  %v408 = vpop.f32.mrb[0].mxu0
  %v409 = vadd.f32 %v81, %v408
  %v410 = vpop.f32.mrb[0].mxu0
  %v411 = vadd.f32 %v85, %v410
  %v412 = vpop.f32.mrb[0].mxu0
  %v413 = vadd.f32 %v81, %v412
  %v414 = vpop.f32.mrb[0].mxu0
  %v415 = vadd.f32 %v85, %v414
  %416 = vmatprep.mubr.bf16.mxu0 0
  %417 = vmatmul.mubr.bf16.gmra.mrb[0].mxu0 %v164
  %v418 = vpop.f32.mrb[0].mxu0
  %v419 = vadd.f32 %v81, %v418
  %v420 = vpop.f32.mrb[0].mxu0
  %v421 = vadd.f32 %v85, %v420
  %v422 = vpop.f32.mrb[0].mxu0
  %v423 = vadd.f32 %v81, %v422
  %v424 = vpop.f32.mrb[0].mxu0
  %v425 = vadd.f32 %v85, %v424
  %426 = vmatprep.mubr.bf16.mxu0 0
  %427 = vmatmul.mubr.bf16.gmra.mrb[0].mxu0 %v165
  %v428 = vpop.f32.mrb[0].mxu0
  %v429 = vadd.f32 %v81, %v428
  %v430 = vpop.f32.mrb[0].mxu0
  %v431 = vadd.f32 %v85, %v430
  %v432 = vpop.f32.mrb[0].mxu0
  %v433 = vadd.f32 %v81, %v432
  %v434 = vpop.f32.mrb[0].mxu0
  %v435 = vadd.f32 %v85, %v434
  %436 = vmatprep.mubr.bf16.mxu0 0
  %437 = vmatmul.mubr.bf16.gmra.mrb[0].mxu0 %v166
  %v438 = vpop.f32.mrb[0].mxu0
  %v439 = vadd.f32 %v81, %v438
  %v440 = vpop.f32.mrb[0].mxu0
  %v441 = vadd.f32 %v85, %v440
  %v442 = vpop.f32.mrb[0].mxu0
  %v443 = vadd.f32 %v81, %v442
  %v444 = vpop.f32.mrb[0].mxu0
  %v445 = vadd.f32 %v85, %v444
  %446 = vmatprep.mubr.bf16.mxu0 0
  %447 = vmatmul.mubr.bf16.gmra.mrb[0].mxu0 %v167
  %v448 = vpop.f32.mrb[0].mxu0
  %v449 = vadd.f32 %v81, %v448
  %v450 = vpop.f32.mrb[0].mxu0
  %v451 = vadd.f32 %v85, %v450
  %v452 = vpop.f32.mrb[0].mxu0
  %v453 = vadd.f32 %v81, %v452
  %v454 = vpop.f32.mrb[0].mxu0
  %v455 = vadd.f32 %v85, %v454
  %456 = vdwg.mxu0
  %v457 = vmax.f32 %v299, 0.0
  %v458 = vmax.f32 %v301, 0.0
  %v459 = vmax.f32 %v303, 0.0
  %v460 = vmax.f32 %v305, 0.0
  %v461 = vmax.f32 %v309, 0.0
  %v462 = vmax.f32 %v311, 0.0
  %v463 = vmax.f32 %v313, 0.0
  %v464 = vmax.f32 %v315, 0.0
  %v465 = vmax.f32 %v319, 0.0
  %v466 = vmax.f32 %v321, 0.0
  %v467 = vmax.f32 %v323, 0.0
  %v468 = vmax.f32 %v325, 0.0
  %v469 = vmax.f32 %v329, 0.0
  %v470 = vmax.f32 %v331, 0.0
  %v471 = vmax.f32 %v333, 0.0
  %v472 = vmax.f32 %v335, 0.0
  %v473 = vmax.f32 %v339, 0.0
  %v474 = vmax.f32 %v341, 0.0
  %v475 = vmax.f32 %v343, 0.0
  %v476 = vmax.f32 %v345, 0.0
  %v477 = vmax.f32 %v349, 0.0
  %v478 = vmax.f32 %v351, 0.0
  %v479 = vmax.f32 %v353, 0.0
  %v480 = vmax.f32 %v355, 0.0
  %v481 = vmax.f32 %v359, 0.0
  %v482 = vmax.f32 %v361, 0.0
  %v483 = vmax.f32 %v363, 0.0
  %v484 = vmax.f32 %v365, 0.0
  %v485 = vmax.f32 %v369, 0.0
  %v486 = vmax.f32 %v371, 0.0
  %v487 = vmax.f32 %v373, 0.0
  %v488 = vmax.f32 %v375, 0.0
  %v489 = vmax.f32 %v379, 0.0
  %v490 = vmax.f32 %v381, 0.0
  %v491 = vmax.f32 %v383, 0.0
  %v492 = vmax.f32 %v385, 0.0
  %v493 = vmax.f32 %v389, 0.0
  %v494 = vmax.f32 %v391, 0.0
  %v495 = vmax.f32 %v393, 0.0
  %v496 = vmax.f32 %v395, 0.0
  %v497 = vmax.f32 %v399, 0.0
  %v498 = vmax.f32 %v401, 0.0
  %v499 = vmax.f32 %v403, 0.0
  %v500 = vmax.f32 %v405, 0.0
  %v501 = vmax.f32 %v409, 0.0
  %v502 = vmax.f32 %v411, 0.0
  %v503 = vmax.f32 %v413, 0.0
  %v504 = vmax.f32 %v415, 0.0
  %v505 = vmax.f32 %v419, 0.0
  %v506 = vmax.f32 %v421, 0.0
  %v507 = vmax.f32 %v423, 0.0
  %v508 = vmax.f32 %v425, 0.0
  %v509 = vmax.f32 %v429, 0.0
  %v510 = vmax.f32 %v431, 0.0
  %v511 = vmax.f32 %v433, 0.0
  %v512 = vmax.f32 %v435, 0.0
  %v513 = vmax.f32 %v439, 0.0
  %v514 = vmax.f32 %v441, 0.0
  %v515 = vmax.f32 %v443, 0.0
  %v516 = vmax.f32 %v445, 0.0
  %v517 = vmax.f32 %v449, 0.0
  %v518 = vmax.f32 %v451, 0.0
  %v519 = vmax.f32 %v453, 0.0
  %v520 = vmax.f32 %v455, 0.0
  %v521 = vpack.c.bf16 %v459, %v457
  %v522 = vpack.c.bf16 %v460, %v458
  %v523 = vpack.c.bf16 %v463, %v461
  %v524 = vpack.c.bf16 %v464, %v462
  %v525 = vpack.c.bf16 %v467, %v465
  %v526 = vpack.c.bf16 %v468, %v466
  %v527 = vpack.c.bf16 %v471, %v469
  %v528 = vpack.c.bf16 %v472, %v470
  %v529 = vpack.c.bf16 %v475, %v473
  %v530 = vpack.c.bf16 %v476, %v474
  %v531 = vpack.c.bf16 %v479, %v477
  %v532 = vpack.c.bf16 %v480, %v478
  %v533 = vpack.c.bf16 %v483, %v481
  %v534 = vpack.c.bf16 %v484, %v482
  %v535 = vpack.c.bf16 %v487, %v485
  %v536 = vpack.c.bf16 %v488, %v486
  %v537 = vpack.c.bf16 %v491, %v489
  %v538 = vpack.c.bf16 %v492, %v490
  %v539 = vpack.c.bf16 %v495, %v493
  %v540 = vpack.c.bf16 %v496, %v494
  %v541 = vpack.c.bf16 %v499, %v497
  %v542 = vpack.c.bf16 %v500, %v498
  %v543 = vpack.c.bf16 %v503, %v501
  %v544 = vpack.c.bf16 %v504, %v502
  %v545 = vpack.c.bf16 %v507, %v505
  %v546 = vpack.c.bf16 %v508, %v506
  %v547 = vpack.c.bf16 %v511, %v509
  %v548 = vpack.c.bf16 %v512, %v510
  %v549 = vpack.c.bf16 %v515, %v513
  %v550 = vpack.c.bf16 %v516, %v514
  %v551 = vpack.c.bf16 %v519, %v517
  %v552 = vpack.c.bf16 %v520, %v518
  %v553 = vld [vmem:[%s3] sm:$0xff]
  %v554 = vld [vmem:[%s3 + $0x8] sm:$0xff]
  %v555 = vld [vmem:[%s3 + $0x10] sm:$0xff]
  %v556 = vld [vmem:[%s3 + $0x18] sm:$0xff]
  %v557 = vld [vmem:[%s3 + $0x20] sm:$0xff]
  %v558 = vld [vmem:[%s3 + $0x28] sm:$0xff]
  %v559 = vld [vmem:[%s3 + $0x30] sm:$0xff]
  %v560 = vld [vmem:[%s3 + $0x38] sm:$0xff]
  %v561 = vld [vmem:[%s3 + $0x40] sm:$0xff]
  %v562 = vld [vmem:[%s3 + $0x48] sm:$0xff]
  %v563 = vld [vmem:[%s3 + $0x50] sm:$0xff]
  %v564 = vld [vmem:[%s3 + $0x58] sm:$0xff]
  %v565 = vld [vmem:[%s3 + $0x60] sm:$0xff]
  %v566 = vld [vmem:[%s3 + $0x68] sm:$0xff]
  %v567 = vld [vmem:[%s3 + $0x70] sm:$0xff]
  %v568 = vld [vmem:[%s3 + $0x78] sm:$0xff]
  %v569 = vld [vmem:[%s3 + $0x80] sm:$0xff]
  %v570 = vld [vmem:[%s3 + $0x88] sm:$0xff]
  %v571 = vld [vmem:[%s3 + $0x90] sm:$0xff]
  %v572 = vld [vmem:[%s3 + $0x98] sm:$0xff]
  %v573 = vld [vmem:[%s3 + $0xa0] sm:$0xff]
  %v574 = vld [vmem:[%s3 + $0xa8] sm:$0xff]
  %v575 = vld [vmem:[%s3 + $0xb0] sm:$0xff]
  %v576 = vld [vmem:[%s3 + $0xb8] sm:$0xff]
  %v577 = vld [vmem:[%s3 + $0xc0] sm:$0xff]
  %v578 = vld [vmem:[%s3 + $0xc8] sm:$0xff]
  %v579 = vld [vmem:[%s3 + $0xd0] sm:$0xff]
  %v580 = vld [vmem:[%s3 + $0xd8] sm:$0xff]
  %v581 = vld [vmem:[%s3 + $0xe0] sm:$0xff]
  %v582 = vld [vmem:[%s3 + $0xe8] sm:$0xff]
  %v583 = vld [vmem:[%s3 + $0xf0] sm:$0xff]
  %v584 = vld [vmem:[%s3 + $0xf8] sm:$0xff]
  %v585 = vld [vmem:[%s4] sm:$0x3]
  %v587 = vlaneseq
  %v588 = vshrl.u32 %v587, 7
  %v589 = vsub.s32 0, %v588
  %v590 = vrot.slane %v585, %v589
  %v591 = vlaneseq
  %v592 = vshrl.u32 %v591, 7
  %v593 = vsub.s32 1, %v592
  %v594 = vrot.slane %v585, %v593
  %v629 = vunpack.c.l.b16 %v553
  %v630 = vunpack.c.h.b16 %v553
  %v631 = vunpack.c.l.b16 %v554
  %v632 = vunpack.c.h.b16 %v554
  %v633 = vunpack.c.l.b16 %v555
  %v634 = vunpack.c.h.b16 %v555
  %v635 = vunpack.c.l.b16 %v556
  %v636 = vunpack.c.h.b16 %v556
  %v637 = vunpack.c.l.b16 %v557
  %v638 = vunpack.c.h.b16 %v557
  %v639 = vunpack.c.l.b16 %v558
  %v640 = vunpack.c.h.b16 %v558
  %v641 = vunpack.c.l.b16 %v559
  %v642 = vunpack.c.h.b16 %v559
  %v643 = vunpack.c.l.b16 %v560
  %v644 = vunpack.c.h.b16 %v560
  %v645 = vunpack.c.l.b16 %v561
  %v646 = vunpack.c.h.b16 %v561
  %v647 = vunpack.c.l.b16 %v562
  %v648 = vunpack.c.h.b16 %v562
  %v649 = vunpack.c.l.b16 %v563
  %v650 = vunpack.c.h.b16 %v563
  %v651 = vunpack.c.l.b16 %v564
  %v652 = vunpack.c.h.b16 %v564
  %v653 = vunpack.c.l.b16 %v565
  %v654 = vunpack.c.h.b16 %v565
  %v655 = vunpack.c.l.b16 %v566
  %v656 = vunpack.c.h.b16 %v566
  %v657 = vunpack.c.l.b16 %v567
  %v658 = vunpack.c.h.b16 %v567
  %v659 = vunpack.c.l.b16 %v568
  %v660 = vunpack.c.h.b16 %v568
  %v661 = vunpack.c.l.b16 %v569
  %v662 = vunpack.c.h.b16 %v569
  %v663 = vunpack.c.l.b16 %v570
  %v664 = vunpack.c.h.b16 %v570
  %v665 = vunpack.c.l.b16 %v571
  %v666 = vunpack.c.h.b16 %v571
  %v667 = vunpack.c.l.b16 %v572
  %v668 = vunpack.c.h.b16 %v572
  %v669 = vunpack.c.l.b16 %v573
  %v670 = vunpack.c.h.b16 %v573
  %v671 = vunpack.c.l.b16 %v574
  %v672 = vunpack.c.h.b16 %v574
  %v673 = vunpack.c.l.b16 %v575
  %v674 = vunpack.c.h.b16 %v575
  %v675 = vunpack.c.l.b16 %v576
  %v676 = vunpack.c.h.b16 %v576
  %v677 = vunpack.c.l.b16 %v577
  %v678 = vunpack.c.h.b16 %v577
  %v679 = vunpack.c.l.b16 %v578
  %v680 = vunpack.c.h.b16 %v578
  %v681 = vunpack.c.l.b16 %v579
  %v682 = vunpack.c.h.b16 %v579
  %v683 = vunpack.c.l.b16 %v580
  %v684 = vunpack.c.h.b16 %v580
  %v685 = vunpack.c.l.b16 %v581
  %v686 = vunpack.c.h.b16 %v581
  %v687 = vunpack.c.l.b16 %v582
  %v688 = vunpack.c.h.b16 %v582
  %v689 = vunpack.c.l.b16 %v583
  %v690 = vunpack.c.h.b16 %v583
  %v691 = vunpack.c.l.b16 %v584
  %v692 = vunpack.c.h.b16 %v584
  %v693 = vpack.c.b16 %v631, %v629
  %v694 = vpack.c.b16 %v632, %v630
  %v695 = vpack.c.b16 %v635, %v633
  %v696 = vpack.c.b16 %v636, %v634
  %v697 = vpack.c.b16 %v639, %v637
  %v698 = vpack.c.b16 %v640, %v638
  %v699 = vpack.c.b16 %v643, %v641
  %v700 = vpack.c.b16 %v644, %v642
  %v701 = vpack.c.b16 %v647, %v645
  %v702 = vpack.c.b16 %v648, %v646
  %v703 = vpack.c.b16 %v651, %v649
  %v704 = vpack.c.b16 %v652, %v650
  %v705 = vpack.c.b16 %v655, %v653
  %v706 = vpack.c.b16 %v656, %v654
  %v707 = vpack.c.b16 %v659, %v657
  %v708 = vpack.c.b16 %v660, %v658
  %v709 = vpack.c.b16 %v663, %v661
  %v710 = vpack.c.b16 %v664, %v662
  %v711 = vpack.c.b16 %v667, %v665
  %v712 = vpack.c.b16 %v668, %v666
  %v713 = vpack.c.b16 %v671, %v669
  %v714 = vpack.c.b16 %v672, %v670
  %v715 = vpack.c.b16 %v675, %v673
  %v716 = vpack.c.b16 %v676, %v674
  %v717 = vpack.c.b16 %v679, %v677
  %v718 = vpack.c.b16 %v680, %v678
  %v719 = vpack.c.b16 %v683, %v681
  %v720 = vpack.c.b16 %v684, %v682
  %v721 = vpack.c.b16 %v687, %v685
  %v722 = vpack.c.b16 %v688, %v686
  %v723 = vpack.c.b16 %v691, %v689
  %v724 = vpack.c.b16 %v692, %v690
  %757 = vmatprep.subr.bf16.mxu0 %v694
  %758 = vmatpush1.bf16.msra.mxu0 %v693
  %759 = vmatprep.subr.bf16.mxu0 %v696
  %760 = vmatpush1.bf16.msra.mxu0 %v695
  %761 = vmatprep.subr.bf16.mxu0 %v698
  %762 = vmatpush1.bf16.msra.mxu0 %v697
  %763 = vmatprep.subr.bf16.mxu0 %v700
  %764 = vmatpush1.bf16.msra.mxu0 %v699
  %765 = vmatprep.subr.bf16.mxu0 %v702
  %766 = vmatpush1.bf16.msra.mxu0 %v701
  %767 = vmatprep.subr.bf16.mxu0 %v704
  %768 = vmatpush1.bf16.msra.mxu0 %v703
  %769 = vmatprep.subr.bf16.mxu0 %v706
  %770 = vmatpush1.bf16.msra.mxu0 %v705
  %771 = vmatprep.subr.bf16.mxu0 %v708
  %772 = vmatpush1.bf16.msra.mxu0 %v707
  %773 = vmatprep.subr.bf16.mxu0 %v710
  %774 = vmatpush1.bf16.msra.mxu0 %v709
  %775 = vmatprep.subr.bf16.mxu0 %v712
  %776 = vmatpush1.bf16.msra.mxu0 %v711
  %777 = vmatprep.subr.bf16.mxu0 %v714
  %778 = vmatpush1.bf16.msra.mxu0 %v713
  %779 = vmatprep.subr.bf16.mxu0 %v716
  %780 = vmatpush1.bf16.msra.mxu0 %v715
  %781 = vmatprep.subr.bf16.mxu0 %v718
  %782 = vmatpush1.bf16.msra.mxu0 %v717
  %783 = vmatprep.subr.bf16.mxu0 %v720
  %784 = vmatpush1.bf16.msra.mxu0 %v719
  %785 = vmatprep.subr.bf16.mxu0 %v722
  %786 = vmatpush1.bf16.msra.mxu0 %v721
  %787 = vmatprep.subr.bf16.mxu0 %v724
  %788 = vmatpush1.bf16.msra.mxu0 %v723
  %789 = vmatprep.mubr.bf16.mxu0 %v522
  %790 = vmatmul.mubr.bf16.gmra.mrb[0].mxu0 %v521
  %v791 = vpop.f32.mrb[0].mxu0
  %v792 = vadd.f32 %v590, %v791
  %v793 = vpop.f32.mrb[0].mxu0
  %v794 = vadd.f32 %v594, %v793
  %v795 = vpop.f32.mrb[0].mxu0
  %v796 = vadd.f32 %v590, %v795
  %v797 = vpop.f32.mrb[0].mxu0
  %v798 = vadd.f32 %v594, %v797
  %799 = vmatprep.mubr.bf16.mxu0 %v524
  %800 = vmatmul.mubr.bf16.gmra.mrb[0].mxu0 %v523
  %v801 = vpop.f32.mrb[0].mxu0
  %v802 = vadd.f32 %v590, %v801
  %v803 = vpop.f32.mrb[0].mxu0
  %v804 = vadd.f32 %v594, %v803
  %v805 = vpop.f32.mrb[0].mxu0
  %v806 = vadd.f32 %v590, %v805
  %v807 = vpop.f32.mrb[0].mxu0
  %v808 = vadd.f32 %v594, %v807
  %809 = vmatprep.mubr.bf16.mxu0 %v526
  %810 = vmatmul.mubr.bf16.gmra.mrb[0].mxu0 %v525
  %v811 = vpop.f32.mrb[0].mxu0
  %v812 = vadd.f32 %v590, %v811
  %v813 = vpop.f32.mrb[0].mxu0
  %v814 = vadd.f32 %v594, %v813
  %v815 = vpop.f32.mrb[0].mxu0
  %v816 = vadd.f32 %v590, %v815
  %v817 = vpop.f32.mrb[0].mxu0
  %v818 = vadd.f32 %v594, %v817
  %819 = vmatprep.mubr.bf16.mxu0 %v528
  %820 = vmatmul.mubr.bf16.gmra.mrb[0].mxu0 %v527
  %v821 = vpop.f32.mrb[0].mxu0
  %v822 = vadd.f32 %v590, %v821
  %v823 = vpop.f32.mrb[0].mxu0
  %v824 = vadd.f32 %v594, %v823
  %v825 = vpop.f32.mrb[0].mxu0
  %v826 = vadd.f32 %v590, %v825
  %v827 = vpop.f32.mrb[0].mxu0
  %v828 = vadd.f32 %v594, %v827
  %829 = vmatprep.mubr.bf16.mxu0 %v530
  %830 = vmatmul.mubr.bf16.gmra.mrb[0].mxu0 %v529
  %v831 = vpop.f32.mrb[0].mxu0
  %v832 = vadd.f32 %v590, %v831
  %v833 = vpop.f32.mrb[0].mxu0
  %v834 = vadd.f32 %v594, %v833
  %v835 = vpop.f32.mrb[0].mxu0
  %v836 = vadd.f32 %v590, %v835
  %v837 = vpop.f32.mrb[0].mxu0
  %v838 = vadd.f32 %v594, %v837
  %839 = vmatprep.mubr.bf16.mxu0 %v532
  %840 = vmatmul.mubr.bf16.gmra.mrb[0].mxu0 %v531
  %v841 = vpop.f32.mrb[0].mxu0
  %v842 = vadd.f32 %v590, %v841
  %v843 = vpop.f32.mrb[0].mxu0
  %v844 = vadd.f32 %v594, %v843
  %v845 = vpop.f32.mrb[0].mxu0
  %v846 = vadd.f32 %v590, %v845
  %v847 = vpop.f32.mrb[0].mxu0
  %v848 = vadd.f32 %v594, %v847
  %849 = vmatprep.mubr.bf16.mxu0 %v534
  %850 = vmatmul.mubr.bf16.gmra.mrb[0].mxu0 %v533
  %v851 = vpop.f32.mrb[0].mxu0
  %v852 = vadd.f32 %v590, %v851
  %v853 = vpop.f32.mrb[0].mxu0
  %v854 = vadd.f32 %v594, %v853
  %v855 = vpop.f32.mrb[0].mxu0
  %v856 = vadd.f32 %v590, %v855
  %v857 = vpop.f32.mrb[0].mxu0
  %v858 = vadd.f32 %v594, %v857
  %859 = vmatprep.mubr.bf16.mxu0 %v536
  %860 = vmatmul.mubr.bf16.gmra.mrb[0].mxu0 %v535
  %v861 = vpop.f32.mrb[0].mxu0
  %v862 = vadd.f32 %v590, %v861
  %v863 = vpop.f32.mrb[0].mxu0
  %v864 = vadd.f32 %v594, %v863
  %v865 = vpop.f32.mrb[0].mxu0
  %v866 = vadd.f32 %v590, %v865
  %v867 = vpop.f32.mrb[0].mxu0
  %v868 = vadd.f32 %v594, %v867
  %869 = vmatprep.mubr.bf16.mxu0 %v538
  %870 = vmatmul.mubr.bf16.gmra.mrb[0].mxu0 %v537
  %v871 = vpop.f32.mrb[0].mxu0
  %v872 = vadd.f32 %v590, %v871
  %v873 = vpop.f32.mrb[0].mxu0
  %v874 = vadd.f32 %v594, %v873
  %v875 = vpop.f32.mrb[0].mxu0
  %v876 = vadd.f32 %v590, %v875
  %v877 = vpop.f32.mrb[0].mxu0
  %v878 = vadd.f32 %v594, %v877
  %879 = vmatprep.mubr.bf16.mxu0 %v540
  %880 = vmatmul.mubr.bf16.gmra.mrb[0].mxu0 %v539
  %v881 = vpop.f32.mrb[0].mxu0
  %v882 = vadd.f32 %v590, %v881
  %v883 = vpop.f32.mrb[0].mxu0
  %v884 = vadd.f32 %v594, %v883
  %v885 = vpop.f32.mrb[0].mxu0
  %v886 = vadd.f32 %v590, %v885
  %v887 = vpop.f32.mrb[0].mxu0
  %v888 = vadd.f32 %v594, %v887
  %889 = vmatprep.mubr.bf16.mxu0 %v542
  %890 = vmatmul.mubr.bf16.gmra.mrb[0].mxu0 %v541
  %v891 = vpop.f32.mrb[0].mxu0
  %v892 = vadd.f32 %v590, %v891
  %v893 = vpop.f32.mrb[0].mxu0
  %v894 = vadd.f32 %v594, %v893
  %v895 = vpop.f32.mrb[0].mxu0
  %v896 = vadd.f32 %v590, %v895
  %v897 = vpop.f32.mrb[0].mxu0
  %v898 = vadd.f32 %v594, %v897
  %899 = vmatprep.mubr.bf16.mxu0 %v544
  %900 = vmatmul.mubr.bf16.gmra.mrb[0].mxu0 %v543
  %v901 = vpop.f32.mrb[0].mxu0
  %v902 = vadd.f32 %v590, %v901
  %v903 = vpop.f32.mrb[0].mxu0
  %v904 = vadd.f32 %v594, %v903
  %v905 = vpop.f32.mrb[0].mxu0
  %v906 = vadd.f32 %v590, %v905
  %v907 = vpop.f32.mrb[0].mxu0
  %v908 = vadd.f32 %v594, %v907
  %909 = vmatprep.mubr.bf16.mxu0 %v546
  %910 = vmatmul.mubr.bf16.gmra.mrb[0].mxu0 %v545
  %v911 = vpop.f32.mrb[0].mxu0
  %v912 = vadd.f32 %v590, %v911
  %v913 = vpop.f32.mrb[0].mxu0
  %v914 = vadd.f32 %v594, %v913
  %v915 = vpop.f32.mrb[0].mxu0
  %v916 = vadd.f32 %v590, %v915
  %v917 = vpop.f32.mrb[0].mxu0
  %v918 = vadd.f32 %v594, %v917
  %919 = vmatprep.mubr.bf16.mxu0 %v548
  %920 = vmatmul.mubr.bf16.gmra.mrb[0].mxu0 %v547
  %v921 = vpop.f32.mrb[0].mxu0
  %v922 = vadd.f32 %v590, %v921
  %v923 = vpop.f32.mrb[0].mxu0
  %v924 = vadd.f32 %v594, %v923
  %v925 = vpop.f32.mrb[0].mxu0
  %v926 = vadd.f32 %v590, %v925
  %v927 = vpop.f32.mrb[0].mxu0
  %v928 = vadd.f32 %v594, %v927
  %929 = vmatprep.mubr.bf16.mxu0 %v550
  %930 = vmatmul.mubr.bf16.gmra.mrb[0].mxu0 %v549
  %v931 = vpop.f32.mrb[0].mxu0
  %v932 = vadd.f32 %v590, %v931
  %v933 = vpop.f32.mrb[0].mxu0
  %v934 = vadd.f32 %v594, %v933
  %v935 = vpop.f32.mrb[0].mxu0
  %v936 = vadd.f32 %v590, %v935
  %v937 = vpop.f32.mrb[0].mxu0
  %v938 = vadd.f32 %v594, %v937
  %939 = vmatprep.mubr.bf16.mxu0 %v552
  %940 = vmatmul.mubr.bf16.gmra.mrb[0].mxu0 %v551
  %v941 = vpop.f32.mrb[0].mxu0
  %v942 = vadd.f32 %v590, %v941
  %v943 = vpop.f32.mrb[0].mxu0
  %v944 = vadd.f32 %v594, %v943
  %v945 = vpop.f32.mrb[0].mxu0
  %v946 = vadd.f32 %v590, %v945
  %v947 = vpop.f32.mrb[0].mxu0
  %v948 = vadd.f32 %v594, %v947
  %949 = vdwg.mxu0
  %v950 = vmax.f32 %v792, 0.0
  %v951 = vmax.f32 %v794, 0.0
  %v952 = vmax.f32 %v796, 0.0
  %v953 = vmax.f32 %v798, 0.0
  %v954 = vmax.f32 %v802, 0.0
  %v955 = vmax.f32 %v804, 0.0
  %v956 = vmax.f32 %v806, 0.0
  %v957 = vmax.f32 %v808, 0.0
  %v958 = vmax.f32 %v812, 0.0
  %v959 = vmax.f32 %v814, 0.0
  %v960 = vmax.f32 %v816, 0.0
  %v961 = vmax.f32 %v818, 0.0
  %v962 = vmax.f32 %v822, 0.0
  %v963 = vmax.f32 %v824, 0.0
  %v964 = vmax.f32 %v826, 0.0
  %v965 = vmax.f32 %v828, 0.0
  %v966 = vmax.f32 %v832, 0.0
  %v967 = vmax.f32 %v834, 0.0
  %v968 = vmax.f32 %v836, 0.0
  %v969 = vmax.f32 %v838, 0.0
  %v970 = vmax.f32 %v842, 0.0
  %v971 = vmax.f32 %v844, 0.0
  %v972 = vmax.f32 %v846, 0.0
  %v973 = vmax.f32 %v848, 0.0
  %v974 = vmax.f32 %v852, 0.0
  %v975 = vmax.f32 %v854, 0.0
  %v976 = vmax.f32 %v856, 0.0
  %v977 = vmax.f32 %v858, 0.0
  %v978 = vmax.f32 %v862, 0.0
  %v979 = vmax.f32 %v864, 0.0
  %v980 = vmax.f32 %v866, 0.0
  %v981 = vmax.f32 %v868, 0.0
  %v982 = vmax.f32 %v872, 0.0
  %v983 = vmax.f32 %v874, 0.0
  %v984 = vmax.f32 %v876, 0.0
  %v985 = vmax.f32 %v878, 0.0
  %v986 = vmax.f32 %v882, 0.0
  %v987 = vmax.f32 %v884, 0.0
  %v988 = vmax.f32 %v886, 0.0
  %v989 = vmax.f32 %v888, 0.0
  %v990 = vmax.f32 %v892, 0.0
  %v991 = vmax.f32 %v894, 0.0
  %v992 = vmax.f32 %v896, 0.0
  %v993 = vmax.f32 %v898, 0.0
  %v994 = vmax.f32 %v902, 0.0
  %v995 = vmax.f32 %v904, 0.0
  %v996 = vmax.f32 %v906, 0.0
  %v997 = vmax.f32 %v908, 0.0
  %v998 = vmax.f32 %v912, 0.0
  %v999 = vmax.f32 %v914, 0.0
  %v1000 = vmax.f32 %v916, 0.0
  %v1001 = vmax.f32 %v918, 0.0
  %v1002 = vmax.f32 %v922, 0.0
  %v1003 = vmax.f32 %v924, 0.0
  %v1004 = vmax.f32 %v926, 0.0
  %v1005 = vmax.f32 %v928, 0.0
  %v1006 = vmax.f32 %v932, 0.0
  %v1007 = vmax.f32 %v934, 0.0
  %v1008 = vmax.f32 %v936, 0.0
  %v1009 = vmax.f32 %v938, 0.0
  %v1010 = vmax.f32 %v942, 0.0
  %v1011 = vmax.f32 %v944, 0.0
  %v1012 = vmax.f32 %v946, 0.0
  %v1013 = vmax.f32 %v948, 0.0
  %v1014 = vpack.c.bf16 %v952, %v950
  %v1015 = vpack.c.bf16 %v953, %v951
  %v1016 = vpack.c.bf16 %v956, %v954
  %v1017 = vpack.c.bf16 %v957, %v955
  %v1018 = vpack.c.bf16 %v960, %v958
  %v1019 = vpack.c.bf16 %v961, %v959
  %v1020 = vpack.c.bf16 %v964, %v962
  %v1021 = vpack.c.bf16 %v965, %v963
  %v1022 = vpack.c.bf16 %v968, %v966
  %v1023 = vpack.c.bf16 %v969, %v967
  %v1024 = vpack.c.bf16 %v972, %v970
  %v1025 = vpack.c.bf16 %v973, %v971
  %v1026 = vpack.c.bf16 %v976, %v974
  %v1027 = vpack.c.bf16 %v977, %v975
  %v1028 = vpack.c.bf16 %v980, %v978
  %v1029 = vpack.c.bf16 %v981, %v979
  %v1030 = vpack.c.bf16 %v984, %v982
  %v1031 = vpack.c.bf16 %v985, %v983
  %v1032 = vpack.c.bf16 %v988, %v986
  %v1033 = vpack.c.bf16 %v989, %v987
  %v1034 = vpack.c.bf16 %v992, %v990
  %v1035 = vpack.c.bf16 %v993, %v991
  %v1036 = vpack.c.bf16 %v996, %v994
  %v1037 = vpack.c.bf16 %v997, %v995
  %v1038 = vpack.c.bf16 %v1000, %v998
  %v1039 = vpack.c.bf16 %v1001, %v999
  %v1040 = vpack.c.bf16 %v1004, %v1002
  %v1041 = vpack.c.bf16 %v1005, %v1003
  %v1042 = vpack.c.bf16 %v1008, %v1006
  %v1043 = vpack.c.bf16 %v1009, %v1007
  %v1044 = vpack.c.bf16 %v1012, %v1010
  %v1045 = vpack.c.bf16 %v1013, %v1011
  %v1046 = vld [vmem:[%s5] sm:$0xf]
  %v1047 = vld [vmem:[%s5 + $0x4] sm:$0xf]
  %v1048 = vld [vmem:[%s5 + $0x8] sm:$0xf]
  %v1049 = vld [vmem:[%s5 + $0xc] sm:$0xf]
  %v1050 = vld [vmem:[%s5 + $0x10] sm:$0xf]
  %v1051 = vld [vmem:[%s5 + $0x14] sm:$0xf]
  %v1052 = vld [vmem:[%s5 + $0x18] sm:$0xf]
  %v1053 = vld [vmem:[%s5 + $0x1c] sm:$0xf]
  %v1054 = vld [vmem:[%s5 + $0x20] sm:$0xf]
  %v1055 = vld [vmem:[%s5 + $0x24] sm:$0xf]
  %v1056 = vld [vmem:[%s5 + $0x28] sm:$0xf]
  %v1057 = vld [vmem:[%s5 + $0x2c] sm:$0xf]
  %v1058 = vld [vmem:[%s5 + $0x30] sm:$0xf]
  %v1059 = vld [vmem:[%s5 + $0x34] sm:$0xf]
  %v1060 = vld [vmem:[%s5 + $0x38] sm:$0xf]
  %v1061 = vld [vmem:[%s5 + $0x3c] sm:$0xf]
  %v1062 = vld [vmem:[%s5 + $0x40] sm:$0xf]
  %v1063 = vld [vmem:[%s5 + $0x44] sm:$0xf]
  %v1064 = vld [vmem:[%s5 + $0x48] sm:$0xf]
  %v1065 = vld [vmem:[%s5 + $0x4c] sm:$0xf]
  %v1066 = vld [vmem:[%s5 + $0x50] sm:$0xf]
  %v1067 = vld [vmem:[%s5 + $0x54] sm:$0xf]
  %v1068 = vld [vmem:[%s5 + $0x58] sm:$0xf]
  %v1069 = vld [vmem:[%s5 + $0x5c] sm:$0xf]
  %v1070 = vld [vmem:[%s5 + $0x60] sm:$0xf]
  %v1071 = vld [vmem:[%s5 + $0x64] sm:$0xf]
  %v1072 = vld [vmem:[%s5 + $0x68] sm:$0xf]
  %v1073 = vld [vmem:[%s5 + $0x6c] sm:$0xf]
  %v1074 = vld [vmem:[%s5 + $0x70] sm:$0xf]
  %v1075 = vld [vmem:[%s5 + $0x74] sm:$0xf]
  %v1076 = vld [vmem:[%s5 + $0x78] sm:$0xf]
  %v1077 = vld [vmem:[%s5 + $0x7c] sm:$0xf]
  %s1078 = sld [smem:[#allocation2]]
  %v1079 = vstv %s1078
  %v1112 = vunpack.c.l.b16 %v1046
  %v1113 = vunpack.c.l.b16 %v1047
  %v1114 = vunpack.c.l.b16 %v1048
  %v1115 = vunpack.c.l.b16 %v1049
  %v1116 = vunpack.c.l.b16 %v1050
  %v1117 = vunpack.c.l.b16 %v1051
  %v1118 = vunpack.c.l.b16 %v1052
  %v1119 = vunpack.c.l.b16 %v1053
  %v1120 = vunpack.c.l.b16 %v1054
  %v1121 = vunpack.c.l.b16 %v1055
  %v1122 = vunpack.c.l.b16 %v1056
  %v1123 = vunpack.c.l.b16 %v1057
  %v1124 = vunpack.c.l.b16 %v1058
  %v1125 = vunpack.c.l.b16 %v1059
  %v1126 = vunpack.c.l.b16 %v1060
  %v1127 = vunpack.c.l.b16 %v1061
  %v1128 = vunpack.c.l.b16 %v1062
  %v1129 = vunpack.c.l.b16 %v1063
  %v1130 = vunpack.c.l.b16 %v1064
  %v1131 = vunpack.c.l.b16 %v1065
  %v1132 = vunpack.c.l.b16 %v1066
  %v1133 = vunpack.c.l.b16 %v1067
  %v1134 = vunpack.c.l.b16 %v1068
  %v1135 = vunpack.c.l.b16 %v1069
  %v1136 = vunpack.c.l.b16 %v1070
  %v1137 = vunpack.c.l.b16 %v1071
  %v1138 = vunpack.c.l.b16 %v1072
  %v1139 = vunpack.c.l.b16 %v1073
  %v1140 = vunpack.c.l.b16 %v1074
  %v1141 = vunpack.c.l.b16 %v1075
  %v1142 = vunpack.c.l.b16 %v1076
  %v1143 = vunpack.c.l.b16 %v1077
  %v1144 = vpack.c.b16 %v1113, %v1112
  %v1145 = vpack.c.b16 %v1115, %v1114
  %v1146 = vpack.c.b16 %v1117, %v1116
  %v1147 = vpack.c.b16 %v1119, %v1118
  %v1148 = vpack.c.b16 %v1121, %v1120
  %v1149 = vpack.c.b16 %v1123, %v1122
  %v1150 = vpack.c.b16 %v1125, %v1124
  %v1151 = vpack.c.b16 %v1127, %v1126
  %v1152 = vpack.c.b16 %v1129, %v1128
  %v1153 = vpack.c.b16 %v1131, %v1130
  %v1154 = vpack.c.b16 %v1133, %v1132
  %v1155 = vpack.c.b16 %v1135, %v1134
  %v1156 = vpack.c.b16 %v1137, %v1136
  %v1157 = vpack.c.b16 %v1139, %v1138
  %v1158 = vpack.c.b16 %v1141, %v1140
  %v1159 = vpack.c.b16 %v1143, %v1142
  %1176 = vmatprep.subr.bf16.mxu0 0
  %1177 = vmatpush1.bf16.msra.mxu0 %v1144
  %1178 = vmatprep.subr.bf16.mxu0 0
  %1179 = vmatpush1.bf16.msra.mxu0 %v1145
  %1180 = vmatprep.subr.bf16.mxu0 0
  %1181 = vmatpush1.bf16.msra.mxu0 %v1146
  %1182 = vmatprep.subr.bf16.mxu0 0
  %1183 = vmatpush1.bf16.msra.mxu0 %v1147
  %1184 = vmatprep.subr.bf16.mxu0 0
  %1185 = vmatpush1.bf16.msra.mxu0 %v1148
  %1186 = vmatprep.subr.bf16.mxu0 0
  %1187 = vmatpush1.bf16.msra.mxu0 %v1149
  %1188 = vmatprep.subr.bf16.mxu0 0
  %1189 = vmatpush1.bf16.msra.mxu0 %v1150
  %1190 = vmatprep.subr.bf16.mxu0 0
  %1191 = vmatpush1.bf16.msra.mxu0 %v1151
  %1192 = vmatprep.subr.bf16.mxu0 0
  %1193 = vmatpush1.bf16.msra.mxu0 %v1152
  %1194 = vmatprep.subr.bf16.mxu0 0
  %1195 = vmatpush1.bf16.msra.mxu0 %v1153
  %1196 = vmatprep.subr.bf16.mxu0 0
  %1197 = vmatpush1.bf16.msra.mxu0 %v1154
  %1198 = vmatprep.subr.bf16.mxu0 0
  %1199 = vmatpush1.bf16.msra.mxu0 %v1155
  %1200 = vmatprep.subr.bf16.mxu0 0
  %1201 = vmatpush1.bf16.msra.mxu0 %v1156
  %1202 = vmatprep.subr.bf16.mxu0 0
  %1203 = vmatpush1.bf16.msra.mxu0 %v1157
  %1204 = vmatprep.subr.bf16.mxu0 0
  %1205 = vmatpush1.bf16.msra.mxu0 %v1158
  %1206 = vmatprep.subr.bf16.mxu0 0
  %1207 = vmatpush1.bf16.msra.mxu0 %v1159
  %1208 = vmatprep.mubr.bf16.mxu0 %v1015
  %1209 = vmatmul.mubr.bf16.gmra.mrb[0].mxu0 %v1014
  %v1210 = vpop.f32.mrb[0].mxu0
  %v1211 = vadd.f32 %v1079, %v1210
  %v1212 = vpop.f32.mrb[0].mxu0
  %v1213 = vpop.f32.mrb[0].mxu0
  %v1214 = vadd.f32 %v1079, %v1213
  %v1215 = vpop.f32.mrb[0].mxu0
  %1216 = vmatprep.mubr.bf16.mxu0 %v1017
  %1217 = vmatmul.mubr.bf16.gmra.mrb[0].mxu0 %v1016
  %v1218 = vpop.f32.mrb[0].mxu0
  %v1219 = vadd.f32 %v1079, %v1218
  %v1220 = vpop.f32.mrb[0].mxu0
  %v1221 = vpop.f32.mrb[0].mxu0
  %v1222 = vadd.f32 %v1079, %v1221
  %v1223 = vpop.f32.mrb[0].mxu0
  %1224 = vmatprep.mubr.bf16.mxu0 %v1019
  %1225 = vmatmul.mubr.bf16.gmra.mrb[0].mxu0 %v1018
  %v1226 = vpop.f32.mrb[0].mxu0
  %v1227 = vadd.f32 %v1079, %v1226
  %v1228 = vpop.f32.mrb[0].mxu0
  %v1229 = vpop.f32.mrb[0].mxu0
  %v1230 = vadd.f32 %v1079, %v1229
  %v1231 = vpop.f32.mrb[0].mxu0
  %1232 = vmatprep.mubr.bf16.mxu0 %v1021
  %1233 = vmatmul.mubr.bf16.gmra.mrb[0].mxu0 %v1020
  %v1234 = vpop.f32.mrb[0].mxu0
  %v1235 = vadd.f32 %v1079, %v1234
  %v1236 = vpop.f32.mrb[0].mxu0
  %v1237 = vpop.f32.mrb[0].mxu0
  %v1238 = vadd.f32 %v1079, %v1237
  %v1239 = vpop.f32.mrb[0].mxu0
  %1240 = vmatprep.mubr.bf16.mxu0 %v1023
  %1241 = vmatmul.mubr.bf16.gmra.mrb[0].mxu0 %v1022
  %v1242 = vpop.f32.mrb[0].mxu0
  %v1243 = vadd.f32 %v1079, %v1242
  %v1244 = vpop.f32.mrb[0].mxu0
  %v1245 = vpop.f32.mrb[0].mxu0
  %v1246 = vadd.f32 %v1079, %v1245
  %v1247 = vpop.f32.mrb[0].mxu0
  %1248 = vmatprep.mubr.bf16.mxu0 %v1025
  %1249 = vmatmul.mubr.bf16.gmra.mrb[0].mxu0 %v1024
  %v1250 = vpop.f32.mrb[0].mxu0
  %v1251 = vadd.f32 %v1079, %v1250
  %v1252 = vpop.f32.mrb[0].mxu0
  %v1253 = vpop.f32.mrb[0].mxu0
  %v1254 = vadd.f32 %v1079, %v1253
  %v1255 = vpop.f32.mrb[0].mxu0
  %1256 = vmatprep.mubr.bf16.mxu0 %v1027
  %1257 = vmatmul.mubr.bf16.gmra.mrb[0].mxu0 %v1026
  %v1258 = vpop.f32.mrb[0].mxu0
  %v1259 = vadd.f32 %v1079, %v1258
  %v1260 = vpop.f32.mrb[0].mxu0
  %v1261 = vpop.f32.mrb[0].mxu0
  %v1262 = vadd.f32 %v1079, %v1261
  %v1263 = vpop.f32.mrb[0].mxu0
  %1264 = vmatprep.mubr.bf16.mxu0 %v1029
  %1265 = vmatmul.mubr.bf16.gmra.mrb[0].mxu0 %v1028
  %v1266 = vpop.f32.mrb[0].mxu0
  %v1267 = vadd.f32 %v1079, %v1266
  %v1268 = vpop.f32.mrb[0].mxu0
  %v1269 = vpop.f32.mrb[0].mxu0
  %v1270 = vadd.f32 %v1079, %v1269
  %v1271 = vpop.f32.mrb[0].mxu0
  %1272 = vmatprep.mubr.bf16.mxu0 %v1031
  %1273 = vmatmul.mubr.bf16.gmra.mrb[0].mxu0 %v1030
  %v1274 = vpop.f32.mrb[0].mxu0
  %v1275 = vadd.f32 %v1079, %v1274
  %v1276 = vpop.f32.mrb[0].mxu0
  %v1277 = vpop.f32.mrb[0].mxu0
  %v1278 = vadd.f32 %v1079, %v1277
  %v1279 = vpop.f32.mrb[0].mxu0
  %1280 = vmatprep.mubr.bf16.mxu0 %v1033
  %1281 = vmatmul.mubr.bf16.gmra.mrb[0].mxu0 %v1032
  %v1282 = vpop.f32.mrb[0].mxu0
  %v1283 = vadd.f32 %v1079, %v1282
  %v1284 = vpop.f32.mrb[0].mxu0
  %v1285 = vpop.f32.mrb[0].mxu0
  %v1286 = vadd.f32 %v1079, %v1285
  %v1287 = vpop.f32.mrb[0].mxu0
  %1288 = vmatprep.mubr.bf16.mxu0 %v1035
  %1289 = vmatmul.mubr.bf16.gmra.mrb[0].mxu0 %v1034
  %v1290 = vpop.f32.mrb[0].mxu0
  %v1291 = vadd.f32 %v1079, %v1290
  %v1292 = vpop.f32.mrb[0].mxu0
  %v1293 = vpop.f32.mrb[0].mxu0
  %v1294 = vadd.f32 %v1079, %v1293
  %v1295 = vpop.f32.mrb[0].mxu0
  %1296 = vmatprep.mubr.bf16.mxu0 %v1037
  %1297 = vmatmul.mubr.bf16.gmra.mrb[0].mxu0 %v1036
  %v1298 = vpop.f32.mrb[0].mxu0
  %v1299 = vadd.f32 %v1079, %v1298
  %v1300 = vpop.f32.mrb[0].mxu0
  %v1301 = vpop.f32.mrb[0].mxu0
  %v1302 = vadd.f32 %v1079, %v1301
  %v1303 = vpop.f32.mrb[0].mxu0
  %1304 = vmatprep.mubr.bf16.mxu0 %v1039
  %1305 = vmatmul.mubr.bf16.gmra.mrb[0].mxu0 %v1038
  %v1306 = vpop.f32.mrb[0].mxu0
  %v1307 = vadd.f32 %v1079, %v1306
  %v1308 = vpop.f32.mrb[0].mxu0
  %v1309 = vpop.f32.mrb[0].mxu0
  %v1310 = vadd.f32 %v1079, %v1309
  %v1311 = vpop.f32.mrb[0].mxu0
  %1312 = vmatprep.mubr.bf16.mxu0 %v1041
  %1313 = vmatmul.mubr.bf16.gmra.mrb[0].mxu0 %v1040
  %v1314 = vpop.f32.mrb[0].mxu0
  %v1315 = vadd.f32 %v1079, %v1314
  %v1316 = vpop.f32.mrb[0].mxu0
  %v1317 = vpop.f32.mrb[0].mxu0
  %v1318 = vadd.f32 %v1079, %v1317
  %v1319 = vpop.f32.mrb[0].mxu0
  %1320 = vmatprep.mubr.bf16.mxu0 %v1043
  %1321 = vmatmul.mubr.bf16.gmra.mrb[0].mxu0 %v1042
  %v1322 = vpop.f32.mrb[0].mxu0
  %v1323 = vadd.f32 %v1079, %v1322
  %v1324 = vpop.f32.mrb[0].mxu0
  %v1325 = vpop.f32.mrb[0].mxu0
  %v1326 = vadd.f32 %v1079, %v1325
  %v1327 = vpop.f32.mrb[0].mxu0
  %1328 = vmatprep.mubr.bf16.mxu0 %v1045
  %1329 = vmatmul.mubr.bf16.gmra.mrb[0].mxu0 %v1044
  %v1330 = vpop.f32.mrb[0].mxu0
  %v1331 = vadd.f32 %v1079, %v1330
  %v1332 = vpop.f32.mrb[0].mxu0
  %v1333 = vpop.f32.mrb[0].mxu0
  %v1334 = vadd.f32 %v1079, %v1333
  %v1335 = vpop.f32.mrb[0].mxu0
  %1336 = vdwg.mxu0
  %v1337 = vxor.u32 %v1211, 2147483648
  %v1338 = vxor.u32 %v1214, 2147483648
  %v1339 = vxor.u32 %v1219, 2147483648
  %v1340 = vxor.u32 %v1222, 2147483648
  %v1341 = vxor.u32 %v1227, 2147483648
  %v1342 = vxor.u32 %v1230, 2147483648
  %v1343 = vxor.u32 %v1235, 2147483648
  %v1344 = vxor.u32 %v1238, 2147483648
  %v1345 = vxor.u32 %v1243, 2147483648
  %v1346 = vxor.u32 %v1246, 2147483648
  %v1347 = vxor.u32 %v1251, 2147483648
  %v1348 = vxor.u32 %v1254, 2147483648
  %v1349 = vxor.u32 %v1259, 2147483648
  %v1350 = vxor.u32 %v1262, 2147483648
  %v1351 = vxor.u32 %v1267, 2147483648
  %v1352 = vxor.u32 %v1270, 2147483648
  %v1353 = vxor.u32 %v1275, 2147483648
  %v1354 = vxor.u32 %v1278, 2147483648
  %v1355 = vxor.u32 %v1283, 2147483648
  %v1356 = vxor.u32 %v1286, 2147483648
  %v1357 = vxor.u32 %v1291, 2147483648
  %v1358 = vxor.u32 %v1294, 2147483648
  %v1359 = vxor.u32 %v1299, 2147483648
  %v1360 = vxor.u32 %v1302, 2147483648
  %v1361 = vxor.u32 %v1307, 2147483648
  %v1362 = vxor.u32 %v1310, 2147483648
  %v1363 = vxor.u32 %v1315, 2147483648
  %v1364 = vxor.u32 %v1318, 2147483648
  %v1365 = vxor.u32 %v1323, 2147483648
  %v1366 = vxor.u32 %v1326, 2147483648
  %v1367 = vxor.u32 %v1331, 2147483648
  %v1368 = vxor.u32 %v1334, 2147483648
  %v1369 = vmul.f32 %v1337, 1.442695
  %v1370 = vpow.pop %v1369
  %v1371 = vmul.f32 %v1338, 1.442695
  %v1372 = vpow.pop %v1371
  %v1373 = vmul.f32 %v1339, 1.442695
  %v1374 = vpow.pop %v1373
  %v1375 = vmul.f32 %v1340, 1.442695
  %v1376 = vpow.pop %v1375
  %v1377 = vmul.f32 %v1341, 1.442695
  %v1378 = vpow.pop %v1377
  %v1379 = vmul.f32 %v1342, 1.442695
  %v1380 = vpow.pop %v1379
  %v1381 = vmul.f32 %v1343, 1.442695
  %v1382 = vpow.pop %v1381
  %v1383 = vmul.f32 %v1344, 1.442695
  %v1384 = vpow.pop %v1383
  %v1385 = vmul.f32 %v1345, 1.442695
  %v1386 = vpow.pop %v1385
  %v1387 = vmul.f32 %v1346, 1.442695
  %v1388 = vpow.pop %v1387
  %v1389 = vmul.f32 %v1347, 1.442695
  %v1390 = vpow.pop %v1389
  %v1391 = vmul.f32 %v1348, 1.442695
  %v1392 = vpow.pop %v1391
  %v1393 = vmul.f32 %v1349, 1.442695
  %v1394 = vpow.pop %v1393
  %v1395 = vmul.f32 %v1350, 1.442695
  %v1396 = vpow.pop %v1395
  %v1397 = vmul.f32 %v1351, 1.442695
  %v1398 = vpow.pop %v1397
  %v1399 = vmul.f32 %v1352, 1.442695
  %v1400 = vpow.pop %v1399
  %v1401 = vmul.f32 %v1353, 1.442695
  %v1402 = vpow.pop %v1401
  %v1403 = vmul.f32 %v1354, 1.442695
  %v1404 = vpow.pop %v1403
  %v1405 = vmul.f32 %v1355, 1.442695
  %v1406 = vpow.pop %v1405
  %v1407 = vmul.f32 %v1356, 1.442695
  %v1408 = vpow.pop %v1407
  %v1409 = vmul.f32 %v1357, 1.442695
  %v1410 = vpow.pop %v1409
  %v1411 = vmul.f32 %v1358, 1.442695
  %v1412 = vpow.pop %v1411
  %v1413 = vmul.f32 %v1359, 1.442695
  %v1414 = vpow.pop %v1413
  %v1415 = vmul.f32 %v1360, 1.442695
  %v1416 = vpow.pop %v1415
  %v1417 = vmul.f32 %v1361, 1.442695
  %v1418 = vpow.pop %v1417
  %v1419 = vmul.f32 %v1362, 1.442695
  %v1420 = vpow.pop %v1419
  %v1421 = vmul.f32 %v1363, 1.442695
  %v1422 = vpow.pop %v1421
  %v1423 = vmul.f32 %v1364, 1.442695
  %v1424 = vpow.pop %v1423
  %v1425 = vmul.f32 %v1365, 1.442695
  %v1426 = vpow.pop %v1425
  %v1427 = vmul.f32 %v1366, 1.442695
  %v1428 = vpow.pop %v1427
  %v1429 = vmul.f32 %v1367, 1.442695
  %v1430 = vpow.pop %v1429
  %v1431 = vmul.f32 %v1368, 1.442695
  %v1432 = vpow.pop %v1431
  %v1433 = vadd.f32 %v1370, 1.0
  %v1434 = vadd.f32 %v1372, 1.0
  %v1435 = vadd.f32 %v1374, 1.0
  %v1436 = vadd.f32 %v1376, 1.0
  %v1437 = vadd.f32 %v1378, 1.0
  %v1438 = vadd.f32 %v1380, 1.0
  %v1439 = vadd.f32 %v1382, 1.0
  %v1440 = vadd.f32 %v1384, 1.0
  %v1441 = vadd.f32 %v1386, 1.0
  %v1442 = vadd.f32 %v1388, 1.0
  %v1443 = vadd.f32 %v1390, 1.0
  %v1444 = vadd.f32 %v1392, 1.0
  %v1445 = vadd.f32 %v1394, 1.0
  %v1446 = vadd.f32 %v1396, 1.0
  %v1447 = vadd.f32 %v1398, 1.0
  %v1448 = vadd.f32 %v1400, 1.0
  %v1449 = vadd.f32 %v1402, 1.0
  %v1450 = vadd.f32 %v1404, 1.0
  %v1451 = vadd.f32 %v1406, 1.0
  %v1452 = vadd.f32 %v1408, 1.0
  %v1453 = vadd.f32 %v1410, 1.0
  %v1454 = vadd.f32 %v1412, 1.0
  %v1455 = vadd.f32 %v1414, 1.0
  %v1456 = vadd.f32 %v1416, 1.0
  %v1457 = vadd.f32 %v1418, 1.0
  %v1458 = vadd.f32 %v1420, 1.0
  %v1459 = vadd.f32 %v1422, 1.0
  %v1460 = vadd.f32 %v1424, 1.0
  %v1461 = vadd.f32 %v1426, 1.0
  %v1462 = vadd.f32 %v1428, 1.0
  %v1463 = vadd.f32 %v1430, 1.0
  %v1464 = vadd.f32 %v1432, 1.0
  %v1465 = vrcp.pop %v1433
  %v1466 = vmul.f32 1.0, %v1465
  %v1467 = vrcp.pop %v1434
  %v1468 = vmul.f32 1.0, %v1467
  %v1469 = vrcp.pop %v1435
  %v1470 = vmul.f32 1.0, %v1469
  %v1471 = vrcp.pop %v1436
  %v1472 = vmul.f32 1.0, %v1471
  %v1473 = vrcp.pop %v1437
  %v1474 = vmul.f32 1.0, %v1473
  %v1475 = vrcp.pop %v1438
  %v1476 = vmul.f32 1.0, %v1475
  %v1477 = vrcp.pop %v1439
  %v1478 = vmul.f32 1.0, %v1477
  %v1479 = vrcp.pop %v1440
  %v1480 = vmul.f32 1.0, %v1479
  %v1481 = vrcp.pop %v1441
  %v1482 = vmul.f32 1.0, %v1481
  %v1483 = vrcp.pop %v1442
  %v1484 = vmul.f32 1.0, %v1483
  %v1485 = vrcp.pop %v1443
  %v1486 = vmul.f32 1.0, %v1485
  %v1487 = vrcp.pop %v1444
  %v1488 = vmul.f32 1.0, %v1487
  %v1489 = vrcp.pop %v1445
  %v1490 = vmul.f32 1.0, %v1489
  %v1491 = vrcp.pop %v1446
  %v1492 = vmul.f32 1.0, %v1491
  %v1493 = vrcp.pop %v1447
  %v1494 = vmul.f32 1.0, %v1493
  %v1495 = vrcp.pop %v1448
  %v1496 = vmul.f32 1.0, %v1495
  %v1497 = vrcp.pop %v1449
  %v1498 = vmul.f32 1.0, %v1497
  %v1499 = vrcp.pop %v1450
  %v1500 = vmul.f32 1.0, %v1499
  %v1501 = vrcp.pop %v1451
  %v1502 = vmul.f32 1.0, %v1501
  %v1503 = vrcp.pop %v1452
  %v1504 = vmul.f32 1.0, %v1503
  %v1505 = vrcp.pop %v1453
  %v1506 = vmul.f32 1.0, %v1505
  %v1507 = vrcp.pop %v1454
  %v1508 = vmul.f32 1.0, %v1507
  %v1509 = vrcp.pop %v1455
  %v1510 = vmul.f32 1.0, %v1509
  %v1511 = vrcp.pop %v1456
  %v1512 = vmul.f32 1.0, %v1511
  %v1513 = vrcp.pop %v1457
  %v1514 = vmul.f32 1.0, %v1513
  %v1515 = vrcp.pop %v1458
  %v1516 = vmul.f32 1.0, %v1515
  %v1517 = vrcp.pop %v1459
  %v1518 = vmul.f32 1.0, %v1517
  %v1519 = vrcp.pop %v1460
  %v1520 = vmul.f32 1.0, %v1519
  %v1521 = vrcp.pop %v1461
  %v1522 = vmul.f32 1.0, %v1521
  %v1523 = vrcp.pop %v1462
  %v1524 = vmul.f32 1.0, %v1523
  %v1525 = vrcp.pop %v1463
  %v1526 = vmul.f32 1.0, %v1525
  %v1527 = vrcp.pop %v1464
  %v1528 = vmul.f32 1.0, %v1527
  %vm1529 = vcmask 7168
  %1530 = vst.msk [vmem:[%s7] sm:$0xff] %vm1529, %v1466
  %1531 = vst.msk [vmem:[%s7 + $0x8] sm:$0xff] %vm1529, %v1468
  %1532 = vst.msk [vmem:[%s7 + $0x10] sm:$0xff] %vm1529, %v1470
  %1533 = vst.msk [vmem:[%s7 + $0x18] sm:$0xff] %vm1529, %v1472
  %1534 = vst.msk [vmem:[%s7 + $0x20] sm:$0xff] %vm1529, %v1474
  %1535 = vst.msk [vmem:[%s7 + $0x28] sm:$0xff] %vm1529, %v1476
  %1536 = vst.msk [vmem:[%s7 + $0x30] sm:$0xff] %vm1529, %v1478
  %1537 = vst.msk [vmem:[%s7 + $0x38] sm:$0xff] %vm1529, %v1480
  %1538 = vst.msk [vmem:[%s7 + $0x40] sm:$0xff] %vm1529, %v1482
  %1539 = vst.msk [vmem:[%s7 + $0x48] sm:$0xff] %vm1529, %v1484
  %1540 = vst.msk [vmem:[%s7 + $0x50] sm:$0xff] %vm1529, %v1486
  %1541 = vst.msk [vmem:[%s7 + $0x58] sm:$0xff] %vm1529, %v1488
  %1542 = vst.msk [vmem:[%s7 + $0x60] sm:$0xff] %vm1529, %v1490
  %1543 = vst.msk [vmem:[%s7 + $0x68] sm:$0xff] %vm1529, %v1492
  %1544 = vst.msk [vmem:[%s7 + $0x70] sm:$0xff] %vm1529, %v1494
  %1545 = vst.msk [vmem:[%s7 + $0x78] sm:$0xff] %vm1529, %v1496
  %1546 = vst.msk [vmem:[%s7 + $0x80] sm:$0xff] %vm1529, %v1498
  %1547 = vst.msk [vmem:[%s7 + $0x88] sm:$0xff] %vm1529, %v1500
  %1548 = vst.msk [vmem:[%s7 + $0x90] sm:$0xff] %vm1529, %v1502
  %1549 = vst.msk [vmem:[%s7 + $0x98] sm:$0xff] %vm1529, %v1504
  %1550 = vst.msk [vmem:[%s7 + $0xa0] sm:$0xff] %vm1529, %v1506
  %1551 = vst.msk [vmem:[%s7 + $0xa8] sm:$0xff] %vm1529, %v1508
  %1552 = vst.msk [vmem:[%s7 + $0xb0] sm:$0xff] %vm1529, %v1510
  %1553 = vst.msk [vmem:[%s7 + $0xb8] sm:$0xff] %vm1529, %v1512
  %1554 = vst.msk [vmem:[%s7 + $0xc0] sm:$0xff] %vm1529, %v1514
  %1555 = vst.msk [vmem:[%s7 + $0xc8] sm:$0xff] %vm1529, %v1516
  %1556 = vst.msk [vmem:[%s7 + $0xd0] sm:$0xff] %vm1529, %v1518
  %1557 = vst.msk [vmem:[%s7 + $0xd8] sm:$0xff] %vm1529, %v1520
  %1558 = vst.msk [vmem:[%s7 + $0xe0] sm:$0xff] %vm1529, %v1522
  %1559 = vst.msk [vmem:[%s7 + $0xe8] sm:$0xff] %vm1529, %v1524
  %1560 = vst.msk [vmem:[%s7 + $0xf0] sm:$0xff] %vm1529, %v1526
  %1561 = vst.msk [vmem:[%s7 + $0xf8] sm:$0xff] %vm1529, %v1528
  // Predicated region
  $region30: #{contextual_neural_bandit.1} parent=0 // pred_check
    _
  $region31: #{contextual_neural_bandit.1} parent=0 // pred_check_branch
    %1563 = sbr.rel (0) target = $region33
  $region32: #{contextual_neural_bandit.1} parent=0 // pred_region
    _
  $region33: #{contextual_neural_bandit.1} parent=0 // pred_fallthru
    _
  // Predicated region
  $region34: #{contextual_neural_bandit.1} parent=0 // pred_check
    _
  $region35: #{contextual_neural_bandit.1} parent=0 // pred_check_branch
    %1565 = sbr.rel (0) target = $region37
  $region36: #{contextual_neural_bandit.1} parent=0 // pred_region
    _
  $region37: #{contextual_neural_bandit.1} parent=0 // pred_fallthru
    _

</llo_original>
